<compile_context>
chip_gen: v7x
topology: tpu7x:2x2x1
jax: 0.10.0
libtpu: 0.0.40
codegen_flags: <defaults>
</compile_context>

<pallas_src>
import jax
import jax.numpy as jnp
from jax import lax
from jax.experimental import pallas as pl
from jax.experimental.pallas import tpu as pltpu


def _round_up(x, m):
    return ((x + m - 1) // m) * m


def _choose_time_chunk(S, Bb, D, Hp, itemsize):
    """Largest divisor of S whose streamed x block / x-proj scratch stay small."""
    x_row = Bb * D * itemsize
    proj_row = Bb * 4 * Hp * 4
    budget = 2 * 1024 * 1024
    max_ts = max(1, budget // max(x_row, proj_row))
    ts = int(min(S, max_ts, 128))
    while S % ts != 0:
        ts -= 1
    return ts


def lstm_classifier_kernel(x_ref, w_ih_ref, w_hh_ref, b_ref, wfc_ref, bfc_ref,
                           out_ref, xproj_ref, h_ref, c_ref):
    """One grid step = (batch block b, time chunk t).

    x_ref    : (Ts*Bb, D)    time-major chunk of embedded inputs (row s*Bb+j)
    w_ih_ref : (D, 4*Hp)     gate-padded input weights   [i, f, g, o]
    w_hh_ref : (Hp, 4*Hp)    gate-padded recurrent weights
    b_ref    : (1, 4*Hp)     combined b_ih + b_hh (f32)
    wfc_ref  : (1, Hp)       final Linear weight row (f32)
    bfc_ref  : (1, 1)        final Linear bias (f32)
    out_ref  : (1, Bb)       lane-dense logits for this batch block
    xproj_ref: (Ts*Bb, 4*Hp) f32 scratch for the hoisted input projection
    h_ref,c_ref: (Bb, Hp)    f32 persistent hidden/cell state
    """
    t = pl.program_id(1)
    n_t = pl.num_programs(1)
    Bb, Hp = h_ref.shape
    Ts = x_ref.shape[0] // Bb

    @pl.when(t == 0)
    def _():
        h_ref[...] = jnp.zeros_like(h_ref)
        c_ref[...] = jnp.zeros_like(c_ref)

    # Hoisted input projection: one big-M MXU matmul for the whole chunk,
    # bias folded in, f32 accumulation.  Weights stream straight from VMEM.
    xproj_ref[...] = (
        jnp.dot(x_ref[...], w_ih_ref[...], preferred_element_type=jnp.float32)
        + b_ref[...])

    def sigmoid_t(v):
        # sigmoid(x) = 0.5*tanh(x/2) + 0.5 : one EUP op instead of exp + recip.
        return 0.5 * jnp.tanh(0.5 * v) + 0.5

    def step(s, carry):
        h, c = carry
        off = pl.multiple_of(s * Bb, Bb)
        xp = xproj_ref[pl.ds(off, Bb), :]                       # (Bb, 4Hp)
        gates = xp + jnp.dot(h.astype(w_hh_ref.dtype), w_hh_ref[...],
                             preferred_element_type=jnp.float32)
        # Hp is a multiple of 128 -> every gate slice is lane-aligned.
        i_g = sigmoid_t(gates[:, 0 * Hp:1 * Hp])
        f_g = sigmoid_t(gates[:, 1 * Hp:2 * Hp])
        g_g = jnp.tanh(gates[:, 2 * Hp:3 * Hp])
        o_g = sigmoid_t(gates[:, 3 * Hp:4 * Hp])
        c_new = f_g * c + i_g * g_g
        h_new = o_g * jnp.tanh(c_new)
        return h_new, c_new

    h_new, c_new = lax.fori_loop(0, Ts, step, (h_ref[...], c_ref[...]),
                                 unroll=min(8, Ts))
    h_ref[...] = h_new
    c_ref[...] = c_new

    @pl.when(t == n_t - 1)
    def _():
        # Final Linear(H, 1): VPU multiply + lane reduction, lane-dense store.
        logits = jnp.sum(h_new * wfc_ref[...], axis=1)          # (Bb,)
        out_ref[...] = logits.reshape(1, Bb) + bfc_ref[...]


def _pad_gate_cols(w, H, Hp):
    """(rows, 4*H) -> (rows, 4*Hp): each gate block at a 128-aligned offset."""
    rows = w.shape[0]
    w4 = w.reshape(rows, 4, H)
    out = jnp.zeros((rows, 4, Hp), w.dtype).at[:, :, :H].set(w4)
    return out.reshape(rows, 4 * Hp)


def _prepare_padded_params(params, H, Hp, mxu_dtype):
    w_ih, w_hh, bias, w_fc, b_fc = (params["w_ih"], params["w_hh"],
                                    params["bias"], params["w_fc"],
                                    params["b_fc"])
    w_ih_p = _pad_gate_cols(w_ih, H, Hp).astype(mxu_dtype)            # (D, 4Hp)
    w_hh_p = jnp.zeros((Hp, 4 * Hp), w_hh.dtype).at[:H].set(
        _pad_gate_cols(w_hh, H, Hp)).astype(mxu_dtype)                # (Hp, 4Hp)
    bias_p = _pad_gate_cols(bias, H, Hp).astype(jnp.float32)          # (1, 4Hp)
    wfc_row = jnp.zeros((1, Hp), jnp.float32).at[:, :H].set(w_fc.T)   # (1, Hp)
    return w_ih_p, w_hh_p, bias_p, wfc_row, b_fc.astype(jnp.float32)


def lstm_classifier_forward(x, params, mxu_dtype=jnp.float32):
    """x: (B, S, F) int32 bin indices.  Returns (B,) float32 logits.

    Set mxu_dtype=jnp.bfloat16 on v6e/v7x for higher MXU throughput / half the
    streamed bytes (relax the validation tolerance accordingly).
    """
    emb = params["embedding"]
    B, S, F = x.shape
    E = emb.shape[1]
    D = F * E
    H = params["w_hh"].shape[0]
    Hp = _round_up(H, 128)                 # lane-align the gate slices

    # Batch blocking: sublane-aligned blocks; leading "parallel" grid axis.
    Bb = min(128, _round_up(max(B, 1), 8))
    Bp = _round_up(B, Bb)
    n_bb = Bp // Bb

    itemsize = jnp.dtype(mxu_dtype).itemsize
    Ts = _choose_time_chunk(S, Bb, D, Hp, itemsize)
    n_tc = S // Ts

    # --- Embedding + layout plumbing in plain JAX (on the small int tensor) ---
    # TODO(synk): data-dependent embedding gather stays in XLA; a Pallas DMA
    # gather adds no value at these sizes.
    x_p = jnp.pad(x, ((0, Bp - B), (0, 0), (0, 0)))                   # (Bp,S,F)
    x_bt = x_p.reshape(n_bb, Bb, S, F).transpose(0, 2, 1, 3)          # (nb,S,Bb,F)
    x_emb = emb[x_bt].reshape(n_bb, S * Bb, D).astype(mxu_dtype)      # (nb,S*Bb,D)

    w_ih_p, w_hh_p, bias_p, wfc_row, b_fc = _prepare_padded_params(
        params, H, Hp, mxu_dtype)

    # VMEM budget: 2x (double-buffered) x chunk + weights + scratch + output.
    x_blk_bytes = Ts * Bb * D * itemsize
    weight_bytes = (D * 4 * Hp + Hp * 4 * Hp) * itemsize + (5 * Hp + 1) * 4
    scratch_bytes = (Ts * Bb * 4 * Hp + 2 * Bb * Hp) * 4
    needed = 2 * x_blk_bytes + weight_bytes + scratch_bytes + 2 * Bb * 4
    vmem_limit = int(min(64 * 1024 * 1024, max(2 * needed, 4 * 1024 * 1024)))

    out = pl.pallas_call(
        lstm_classifier_kernel,
        out_shape=jax.ShapeDtypeStruct((n_bb, 1, Bb), jnp.float32),
        grid=(n_bb, n_tc),
        in_specs=[
            pl.BlockSpec((pl.Squeezed(), Ts * Bb, D), lambda b, t: (b, t, 0)),
            pl.BlockSpec((D, 4 * Hp), lambda b, t: (0, 0)),
            pl.BlockSpec((Hp, 4 * Hp), lambda b, t: (0, 0)),
            pl.BlockSpec((1, 4 * Hp), lambda b, t: (0, 0)),
            pl.BlockSpec((1, Hp), lambda b, t: (0, 0)),
            pl.BlockSpec((1, 1), lambda b, t: (0, 0)),
        ],
        out_specs=pl.BlockSpec((pl.Squeezed(), 1, Bb), lambda b, t: (b, 0, 0)),
        scratch_shapes=[
            pltpu.VMEM((Ts * Bb, 4 * Hp), jnp.float32),   # x projection
            pltpu.VMEM((Bb, Hp), jnp.float32),            # h state
            pltpu.VMEM((Bb, Hp), jnp.float32),            # c state
        ],
        compiler_params=pltpu.CompilerParams(
            dimension_semantics=("parallel", "arbitrary"),
            vmem_limit_bytes=vmem_limit),
    )(x_emb, w_ih_p, w_hh_p, bias_p, wfc_row, b_fc)

    return out.reshape(Bp)[:B]     # drop padded batch rows, squeeze(-1)


def init_params(key, n_features, n_bins, embedding_dim, hidden_dim):
    """Deterministic synthetic params matching nn.Embedding / nn.LSTM / nn.Linear."""
    D = n_features * embedding_dim
    H = hidden_dim
    k0, k1, k2, k3, k4, k5, k6 = jax.random.split(key, 7)

    # nn.Embedding(n_bins, embedding_dim, padding_idx=0): N(0,1), row 0 zeroed.
    emb = jax.random.normal(k0, (n_bins, embedding_dim), jnp.float32)
    emb = emb.at[0].set(0.0)

    # nn.LSTM(D, H): uniform(-1/sqrt(H), 1/sqrt(H)); stored transposed (in, 4H).
    bound = 1.0 / jnp.sqrt(jnp.float32(H))
    w_ih = jax.random.uniform(k1, (D, 4 * H), jnp.float32, -bound, bound)
    w_hh = jax.random.uniform(k2, (H, 4 * H), jnp.float32, -bound, bound)
    b_ih = jax.random.uniform(k3, (4 * H,), jnp.float32, -bound, bound)
    b_hh = jax.random.uniform(k4, (4 * H,), jnp.float32, -bound, bound)
    bias = (b_ih + b_hh).reshape(1, 4 * H)

    # nn.Linear(H, 1)
    w_fc = jax.random.uniform(k5, (H, 1), jnp.float32, -bound, bound)
    b_fc = jax.random.uniform(k6, (1, 1), jnp.float32, -bound, bound)

    return {"embedding": emb, "w_ih": w_ih, "w_hh": w_hh,
            "bias": bias, "w_fc": w_fc, "b_fc": b_fc}


def reference_forward(x, params):
    """Pure-JAX f32 reference (semantics of the PyTorch module)."""
    emb, w_ih, w_hh, bias, w_fc, b_fc = (
        params["embedding"], params["w_ih"], params["w_hh"],
        params["bias"], params["w_fc"], params["b_fc"])
    B, S, F = x.shape
    H = w_hh.shape[0]
    x_emb = emb[x].reshape(B, S, -1)

    def step(carry, x_t):
        h, c = carry
        g = x_t @ w_ih + h @ w_hh + bias
        i = jax.nn.sigmoid(g[:, 0 * H:1 * H])
        f = jax.nn.sigmoid(g[:, 1 * H:2 * H])
        gg = jnp.tanh(g[:, 2 * H:3 * H])
        o = jax.nn.sigmoid(g[:, 3 * H:4 * H])
        c = f * c + i * gg
        h = o * jnp.tanh(c)
        return (h, c), None

    h0 = jnp.zeros((B, H), jnp.float32)
    (h, _), _ = jax.lax.scan(step, (h0, h0), jnp.transpose(x_emb, (1, 0, 2)))
    return (h @ w_fc + b_fc)[:, 0]


if __name__ == "__main__":
    # Small shapes consistent with the module's forward.
    batch, seq_len, n_features = 2, 8, 4
    n_bins, embedding_dim, hidden_dim = 16, 8, 32

    key = jax.random.PRNGKey(0)
    k_param, k_x = jax.random.split(key)

    params = init_params(k_param, n_features, n_bins, embedding_dim, hidden_dim)
    x = jax.random.randint(k_x, (batch, seq_len, n_features), 0, n_bins, jnp.int32)

    out = lstm_classifier_forward(x, params)      # f32 MXU path (exact check)
    out = jax.block_until_ready(out)

    ref = jax.block_until_ready(reference_forward(x, params))
    assert out.shape == (batch,)
    assert jnp.allclose(out, ref, atol=1e-5, rtol=1e-5), (out, ref)

    print("KERNEL_OK")
</pallas_src>

<mosaic_0001>
module attributes {stable_mosaic.version = 11 : i64} {
  func.func @lstm_classifier_kernel(%arg0: i32, %arg1: i32, %arg2: memref<1x64x32xf32, #tpu.memory_space<vmem>>, %arg3: memref<32x512xf32, #tpu.memory_space<vmem>>, %arg4: memref<128x512xf32, #tpu.memory_space<vmem>>, %arg5: memref<1x512xf32, #tpu.memory_space<vmem>>, %arg6: memref<1x128xf32, #tpu.memory_space<vmem>>, %arg7: memref<1x1xf32, #tpu.memory_space<vmem>>, %arg8: memref<1x1x8xf32, #tpu.memory_space<vmem>>, %arg9: memref<64x512xf32, #tpu.memory_space<vmem>>, %arg10: memref<8x128xf32, #tpu.memory_space<vmem>>, %arg11: memref<8x128xf32, #tpu.memory_space<vmem>>) attributes {dimension_semantics = [#tpu.dimension_semantics<parallel>, #tpu.dimension_semantics<arbitrary>], iteration_bounds = array<i64: 1, 1>, scalar_prefetch = 0 : i64, scratch_operands = 3 : i64, tpu.core_type = #tpu.core_type<tc>, window_params = [{transform_indices = @transform_0, window_bounds = array<i64: 1, 64, 32>}, {pipeline_mode = #tpu.pipeline_mode<synchronous>, transform_indices = @transform_1, window_bounds = array<i64: 32, 512>}, {pipeline_mode = #tpu.pipeline_mode<synchronous>, transform_indices = @transform_2, window_bounds = array<i64: 128, 512>}, {pipeline_mode = #tpu.pipeline_mode<synchronous>, transform_indices = @transform_3, window_bounds = array<i64: 1, 512>}, {pipeline_mode = #tpu.pipeline_mode<synchronous>, transform_indices = @transform_4, window_bounds = array<i64: 1, 128>}, {pipeline_mode = #tpu.pipeline_mode<synchronous>, transform_indices = @transform_5, window_bounds = array<i64: 1, 1>}, {transform_indices = @transform_6, window_bounds = array<i64: 1, 1, 8>}]} {
    %c0_i32 = arith.constant 0 : i32
    %0 = arith.cmpi eq, %arg1, %c0_i32 : i32
    %1 = arith.extui %0 : i1 to i32
    %c0_i32_0 = arith.constant 0 : i32
    %2 = arith.cmpi ne, %1, %c0_i32_0 : i32
    scf.if %2 {
      %cst_132 = arith.constant 0.000000e+00 : f32
      %322 = vector.broadcast %cst_132 : f32 to vector<8x128xf32>
      %c0_133 = arith.constant 0 : index
      %c0_134 = arith.constant 0 : index
      %323 = vector.load %arg10[%c0_133, %c0_134] : memref<8x128xf32, #tpu.memory_space<vmem>>, vector<8x128xf32>
      tpu.vector_store %arg10[%c0_133, %c0_134], %322 {strides = array<i32>} : memref<8x128xf32, #tpu.memory_space<vmem>>, vector<8x128xf32>,
      %cst_135 = arith.constant 0.000000e+00 : f32
      %324 = vector.broadcast %cst_135 : f32 to vector<8x128xf32>
      %c0_136 = arith.constant 0 : index
      %c0_137 = arith.constant 0 : index
      %325 = vector.load %arg11[%c0_136, %c0_137] : memref<8x128xf32, #tpu.memory_space<vmem>>, vector<8x128xf32>
      tpu.vector_store %arg11[%c0_136, %c0_137], %324 {strides = array<i32>} : memref<8x128xf32, #tpu.memory_space<vmem>>, vector<8x128xf32>,
    } else {
    }
    %c0 = arith.constant 0 : index
    %c0_1 = arith.constant 0 : index
    %c0_2 = arith.constant 0 : index
    %3 = vector.load %arg2[%c0, %c0_1, %c0_2] : memref<1x64x32xf32, #tpu.memory_space<vmem>>, vector<1x64x32xf32>
    %4 = vector.shape_cast %3 : vector<1x64x32xf32> to vector<64x32xf32>
    %c0_3 = arith.constant 0 : index
    %c0_4 = arith.constant 0 : index
    %5 = vector.load %arg3[%c0_3, %c0_4] : memref<32x512xf32, #tpu.memory_space<vmem>>, vector<32x512xf32>
    %cst = arith.constant dense<0.000000e+00> : vector<64x512xf32>
    %6 = tpu.matmul %4, %5, %cst {dimension_numbers = #tpu.dot_dimension_numbers<[1], [0], [0], [1], [0, 0, 1, 1], [], []>} : vector<64x32xf32>, vector<32x512xf32>, vector<64x512xf32> -> vector<64x512xf32>
    %c0_5 = arith.constant 0 : index
    %c0_6 = arith.constant 0 : index
    %7 = vector.load %arg5[%c0_5, %c0_6] : memref<1x512xf32, #tpu.memory_space<vmem>>, vector<1x512xf32>
    %8 = vector.broadcast %7 : vector<1x512xf32> to vector<64x512xf32>
    %9 = arith.addf %6, %8 : vector<64x512xf32>
    %c0_7 = arith.constant 0 : index
    %c0_8 = arith.constant 0 : index
    %10 = vector.load %arg9[%c0_7, %c0_8] : memref<64x512xf32, #tpu.memory_space<vmem>>, vector<64x512xf32>
    tpu.vector_store %arg9[%c0_7, %c0_8], %9 {strides = array<i32>} : memref<64x512xf32, #tpu.memory_space<vmem>>, vector<64x512xf32>,
    %c0_9 = arith.constant 0 : index
    %c0_10 = arith.constant 0 : index
    %11 = vector.load %arg10[%c0_9, %c0_10] : memref<8x128xf32, #tpu.memory_space<vmem>>, vector<8x128xf32>
    %c0_11 = arith.constant 0 : index
    %c0_12 = arith.constant 0 : index
    %12 = vector.load %arg11[%c0_11, %c0_12] : memref<8x128xf32, #tpu.memory_space<vmem>>, vector<8x128xf32>
    %c0_i32_13 = arith.constant 0 : i32
    %c8_i32 = arith.constant 8 : i32
    %13 = arith.muli %c0_i32_13, %c8_i32 : i32
    %14 = tpu.assume_multiple %13, 8 : i32
    %15 = arith.index_cast %14 : i32 to index
    %c0_14 = arith.constant 0 : index
    %16 = vector.load %arg9[%15, %c0_14] : memref<64x512xf32, #tpu.memory_space<vmem>>, vector<8x512xf32>
    %c0_15 = arith.constant 0 : index
    %c0_16 = arith.constant 0 : index
    %17 = vector.load %arg4[%c0_15, %c0_16] : memref<128x512xf32, #tpu.memory_space<vmem>>, vector<128x512xf32>
    %cst_17 = arith.constant dense<0.000000e+00> : vector<8x512xf32>
    %18 = tpu.matmul %11, %17, %cst_17 {dimension_numbers = #tpu.dot_dimension_numbers<[1], [0], [0], [1], [0, 0, 1, 1], [], []>} : vector<8x128xf32>, vector<128x512xf32>, vector<8x512xf32> -> vector<8x512xf32>
    %19 = arith.addf %16, %18 : vector<8x512xf32>
    %20 = vector.extract_strided_slice %19 {offsets = [0, 0], sizes = [8, 128], strides = [1, 1]} : vector<8x512xf32> to vector<8x128xf32>
    %cst_18 = arith.constant 5.000000e-01 : f32
    %21 = vector.broadcast %cst_18 : f32 to vector<8x128xf32>
    %22 = arith.mulf %21, %20 : vector<8x128xf32>
    %23 = math.tanh %22 : vector<8x128xf32>
    %cst_19 = arith.constant 5.000000e-01 : f32
    %24 = vector.broadcast %cst_19 : f32 to vector<8x128xf32>
    %25 = arith.mulf %24, %23 : vector<8x128xf32>
    %cst_20 = arith.constant 5.000000e-01 : f32
    %26 = vector.broadcast %cst_20 : f32 to vector<8x128xf32>
    %27 = arith.addf %25, %26 : vector<8x128xf32>
    %28 = vector.extract_strided_slice %19 {offsets = [0, 128], sizes = [8, 128], strides = [1, 1]} : vector<8x512xf32> to vector<8x128xf32>
    %cst_21 = arith.constant 5.000000e-01 : f32
    %29 = vector.broadcast %cst_21 : f32 to vector<8x128xf32>
    %30 = arith.mulf %29, %28 : vector<8x128xf32>
    %31 = math.tanh %30 : vector<8x128xf32>
    %cst_22 = arith.constant 5.000000e-01 : f32
    %32 = vector.broadcast %cst_22 : f32 to vector<8x128xf32>
    %33 = arith.mulf %32, %31 : vector<8x128xf32>
    %cst_23 = arith.constant 5.000000e-01 : f32
    %34 = vector.broadcast %cst_23 : f32 to vector<8x128xf32>
    %35 = arith.addf %33, %34 : vector<8x128xf32>
    %36 = vector.extract_strided_slice %19 {offsets = [0, 256], sizes = [8, 128], strides = [1, 1]} : vector<8x512xf32> to vector<8x128xf32>
    %37 = math.tanh %36 : vector<8x128xf32>
    %38 = vector.extract_strided_slice %19 {offsets = [0, 384], sizes = [8, 128], strides = [1, 1]} : vector<8x512xf32> to vector<8x128xf32>
    %cst_24 = arith.constant 5.000000e-01 : f32
    %39 = vector.broadcast %cst_24 : f32 to vector<8x128xf32>
    %40 = arith.mulf %39, %38 : vector<8x128xf32>
    %41 = math.tanh %40 : vector<8x128xf32>
    %cst_25 = arith.constant 5.000000e-01 : f32
    %42 = vector.broadcast %cst_25 : f32 to vector<8x128xf32>
    %43 = arith.mulf %42, %41 : vector<8x128xf32>
    %cst_26 = arith.constant 5.000000e-01 : f32
    %44 = vector.broadcast %cst_26 : f32 to vector<8x128xf32>
    %45 = arith.addf %43, %44 : vector<8x128xf32>
    %46 = arith.mulf %35, %12 : vector<8x128xf32>
    %47 = arith.mulf %27, %37 : vector<8x128xf32>
    %48 = arith.addf %46, %47 : vector<8x128xf32>
    %49 = math.tanh %48 : vector<8x128xf32>
    %50 = arith.mulf %45, %49 : vector<8x128xf32>
    %c1_i32 = arith.constant 1 : i32
    %c8_i32_27 = arith.constant 8 : i32
    %51 = arith.muli %c1_i32, %c8_i32_27 : i32
    %52 = tpu.assume_multiple %51, 8 : i32
    %53 = arith.index_cast %52 : i32 to index
    %c0_28 = arith.constant 0 : index
    %54 = vector.load %arg9[%53, %c0_28] : memref<64x512xf32, #tpu.memory_space<vmem>>, vector<8x512xf32>
    %c0_29 = arith.constant 0 : index
    %c0_30 = arith.constant 0 : index
    %55 = vector.load %arg4[%c0_29, %c0_30] : memref<128x512xf32, #tpu.memory_space<vmem>>, vector<128x512xf32>
    %cst_31 = arith.constant dense<0.000000e+00> : vector<8x512xf32>
    %56 = tpu.matmul %50, %55, %cst_31 {dimension_numbers = #tpu.dot_dimension_numbers<[1], [0], [0], [1], [0, 0, 1, 1], [], []>} : vector<8x128xf32>, vector<128x512xf32>, vector<8x512xf32> -> vector<8x512xf32>
    %57 = arith.addf %54, %56 : vector<8x512xf32>
    %58 = vector.extract_strided_slice %57 {offsets = [0, 0], sizes = [8, 128], strides = [1, 1]} : vector<8x512xf32> to vector<8x128xf32>
    %cst_32 = arith.constant 5.000000e-01 : f32
    %59 = vector.broadcast %cst_32 : f32 to vector<8x128xf32>
    %60 = arith.mulf %59, %58 : vector<8x128xf32>
    %61 = math.tanh %60 : vector<8x128xf32>
    %cst_33 = arith.constant 5.000000e-01 : f32
    %62 = vector.broadcast %cst_33 : f32 to vector<8x128xf32>
    %63 = arith.mulf %62, %61 : vector<8x128xf32>
    %cst_34 = arith.constant 5.000000e-01 : f32
    %64 = vector.broadcast %cst_34 : f32 to vector<8x128xf32>
    %65 = arith.addf %63, %64 : vector<8x128xf32>
    %66 = vector.extract_strided_slice %57 {offsets = [0, 128], sizes = [8, 128], strides = [1, 1]} : vector<8x512xf32> to vector<8x128xf32>
    %cst_35 = arith.constant 5.000000e-01 : f32
    %67 = vector.broadcast %cst_35 : f32 to vector<8x128xf32>
    %68 = arith.mulf %67, %66 : vector<8x128xf32>
    %69 = math.tanh %68 : vector<8x128xf32>
    %cst_36 = arith.constant 5.000000e-01 : f32
    %70 = vector.broadcast %cst_36 : f32 to vector<8x128xf32>
    %71 = arith.mulf %70, %69 : vector<8x128xf32>
    %cst_37 = arith.constant 5.000000e-01 : f32
    %72 = vector.broadcast %cst_37 : f32 to vector<8x128xf32>
    %73 = arith.addf %71, %72 : vector<8x128xf32>
    %74 = vector.extract_strided_slice %57 {offsets = [0, 256], sizes = [8, 128], strides = [1, 1]} : vector<8x512xf32> to vector<8x128xf32>
    %75 = math.tanh %74 : vector<8x128xf32>
    %76 = vector.extract_strided_slice %57 {offsets = [0, 384], sizes = [8, 128], strides = [1, 1]} : vector<8x512xf32> to vector<8x128xf32>
    %cst_38 = arith.constant 5.000000e-01 : f32
    %77 = vector.broadcast %cst_38 : f32 to vector<8x128xf32>
    %78 = arith.mulf %77, %76 : vector<8x128xf32>
    %79 = math.tanh %78 : vector<8x128xf32>
    %cst_39 = arith.constant 5.000000e-01 : f32
    %80 = vector.broadcast %cst_39 : f32 to vector<8x128xf32>
    %81 = arith.mulf %80, %79 : vector<8x128xf32>
    %cst_40 = arith.constant 5.000000e-01 : f32
    %82 = vector.broadcast %cst_40 : f32 to vector<8x128xf32>
    %83 = arith.addf %81, %82 : vector<8x128xf32>
    %84 = arith.mulf %73, %48 : vector<8x128xf32>
    %85 = arith.mulf %65, %75 : vector<8x128xf32>
    %86 = arith.addf %84, %85 : vector<8x128xf32>
    %87 = math.tanh %86 : vector<8x128xf32>
    %88 = arith.mulf %83, %87 : vector<8x128xf32>
    %c2_i32 = arith.constant 2 : i32
    %c8_i32_41 = arith.constant 8 : i32
    %89 = arith.muli %c2_i32, %c8_i32_41 : i32
    %90 = tpu.assume_multiple %89, 8 : i32
    %91 = arith.index_cast %90 : i32 to index
    %c0_42 = arith.constant 0 : index
    %92 = vector.load %arg9[%91, %c0_42] : memref<64x512xf32, #tpu.memory_space<vmem>>, vector<8x512xf32>
    %c0_43 = arith.constant 0 : index
    %c0_44 = arith.constant 0 : index
    %93 = vector.load %arg4[%c0_43, %c0_44] : memref<128x512xf32, #tpu.memory_space<vmem>>, vector<128x512xf32>
    %cst_45 = arith.constant dense<0.000000e+00> : vector<8x512xf32>
    %94 = tpu.matmul %88, %93, %cst_45 {dimension_numbers = #tpu.dot_dimension_numbers<[1], [0], [0], [1], [0, 0, 1, 1], [], []>} : vector<8x128xf32>, vector<128x512xf32>, vector<8x512xf32> -> vector<8x512xf32>
    %95 = arith.addf %92, %94 : vector<8x512xf32>
    %96 = vector.extract_strided_slice %95 {offsets = [0, 0], sizes = [8, 128], strides = [1, 1]} : vector<8x512xf32> to vector<8x128xf32>
    %cst_46 = arith.constant 5.000000e-01 : f32
    %97 = vector.broadcast %cst_46 : f32 to vector<8x128xf32>
    %98 = arith.mulf %97, %96 : vector<8x128xf32>
    %99 = math.tanh %98 : vector<8x128xf32>
    %cst_47 = arith.constant 5.000000e-01 : f32
    %100 = vector.broadcast %cst_47 : f32 to vector<8x128xf32>
    %101 = arith.mulf %100, %99 : vector<8x128xf32>
    %cst_48 = arith.constant 5.000000e-01 : f32
    %102 = vector.broadcast %cst_48 : f32 to vector<8x128xf32>
    %103 = arith.addf %101, %102 : vector<8x128xf32>
    %104 = vector.extract_strided_slice %95 {offsets = [0, 128], sizes = [8, 128], strides = [1, 1]} : vector<8x512xf32> to vector<8x128xf32>
    %cst_49 = arith.constant 5.000000e-01 : f32
    %105 = vector.broadcast %cst_49 : f32 to vector<8x128xf32>
    %106 = arith.mulf %105, %104 : vector<8x128xf32>
    %107 = math.tanh %106 : vector<8x128xf32>
    %cst_50 = arith.constant 5.000000e-01 : f32
    %108 = vector.broadcast %cst_50 : f32 to vector<8x128xf32>
    %109 = arith.mulf %108, %107 : vector<8x128xf32>
    %cst_51 = arith.constant 5.000000e-01 : f32
    %110 = vector.broadcast %cst_51 : f32 to vector<8x128xf32>
    %111 = arith.addf %109, %110 : vector<8x128xf32>
    %112 = vector.extract_strided_slice %95 {offsets = [0, 256], sizes = [8, 128], strides = [1, 1]} : vector<8x512xf32> to vector<8x128xf32>
    %113 = math.tanh %112 : vector<8x128xf32>
    %114 = vector.extract_strided_slice %95 {offsets = [0, 384], sizes = [8, 128], strides = [1, 1]} : vector<8x512xf32> to vector<8x128xf32>
    %cst_52 = arith.constant 5.000000e-01 : f32
    %115 = vector.broadcast %cst_52 : f32 to vector<8x128xf32>
    %116 = arith.mulf %115, %114 : vector<8x128xf32>
    %117 = math.tanh %116 : vector<8x128xf32>
    %cst_53 = arith.constant 5.000000e-01 : f32
    %118 = vector.broadcast %cst_53 : f32 to vector<8x128xf32>
    %119 = arith.mulf %118, %117 : vector<8x128xf32>
    %cst_54 = arith.constant 5.000000e-01 : f32
    %120 = vector.broadcast %cst_54 : f32 to vector<8x128xf32>
    %121 = arith.addf %119, %120 : vector<8x128xf32>
    %122 = arith.mulf %111, %86 : vector<8x128xf32>
    %123 = arith.mulf %103, %113 : vector<8x128xf32>
    %124 = arith.addf %122, %123 : vector<8x128xf32>
    %125 = math.tanh %124 : vector<8x128xf32>
    %126 = arith.mulf %121, %125 : vector<8x128xf32>
    %c3_i32 = arith.constant 3 : i32
    %c8_i32_55 = arith.constant 8 : i32
    %127 = arith.muli %c3_i32, %c8_i32_55 : i32
    %128 = tpu.assume_multiple %127, 8 : i32
    %129 = arith.index_cast %128 : i32 to index
    %c0_56 = arith.constant 0 : index
    %130 = vector.load %arg9[%129, %c0_56] : memref<64x512xf32, #tpu.memory_space<vmem>>, vector<8x512xf32>
    %c0_57 = arith.constant 0 : index
    %c0_58 = arith.constant 0 : index
    %131 = vector.load %arg4[%c0_57, %c0_58] : memref<128x512xf32, #tpu.memory_space<vmem>>, vector<128x512xf32>
    %cst_59 = arith.constant dense<0.000000e+00> : vector<8x512xf32>
    %132 = tpu.matmul %126, %131, %cst_59 {dimension_numbers = #tpu.dot_dimension_numbers<[1], [0], [0], [1], [0, 0, 1, 1], [], []>} : vector<8x128xf32>, vector<128x512xf32>, vector<8x512xf32> -> vector<8x512xf32>
    %133 = arith.addf %130, %132 : vector<8x512xf32>
    %134 = vector.extract_strided_slice %133 {offsets = [0, 0], sizes = [8, 128], strides = [1, 1]} : vector<8x512xf32> to vector<8x128xf32>
    %cst_60 = arith.constant 5.000000e-01 : f32
    %135 = vector.broadcast %cst_60 : f32 to vector<8x128xf32>
    %136 = arith.mulf %135, %134 : vector<8x128xf32>
    %137 = math.tanh %136 : vector<8x128xf32>
    %cst_61 = arith.constant 5.000000e-01 : f32
    %138 = vector.broadcast %cst_61 : f32 to vector<8x128xf32>
    %139 = arith.mulf %138, %137 : vector<8x128xf32>
    %cst_62 = arith.constant 5.000000e-01 : f32
    %140 = vector.broadcast %cst_62 : f32 to vector<8x128xf32>
    %141 = arith.addf %139, %140 : vector<8x128xf32>
    %142 = vector.extract_strided_slice %133 {offsets = [0, 128], sizes = [8, 128], strides = [1, 1]} : vector<8x512xf32> to vector<8x128xf32>
    %cst_63 = arith.constant 5.000000e-01 : f32
    %143 = vector.broadcast %cst_63 : f32 to vector<8x128xf32>
    %144 = arith.mulf %143, %142 : vector<8x128xf32>
    %145 = math.tanh %144 : vector<8x128xf32>
    %cst_64 = arith.constant 5.000000e-01 : f32
    %146 = vector.broadcast %cst_64 : f32 to vector<8x128xf32>
    %147 = arith.mulf %146, %145 : vector<8x128xf32>
    %cst_65 = arith.constant 5.000000e-01 : f32
    %148 = vector.broadcast %cst_65 : f32 to vector<8x128xf32>
    %149 = arith.addf %147, %148 : vector<8x128xf32>
    %150 = vector.extract_strided_slice %133 {offsets = [0, 256], sizes = [8, 128], strides = [1, 1]} : vector<8x512xf32> to vector<8x128xf32>
    %151 = math.tanh %150 : vector<8x128xf32>
    %152 = vector.extract_strided_slice %133 {offsets = [0, 384], sizes = [8, 128], strides = [1, 1]} : vector<8x512xf32> to vector<8x128xf32>
    %cst_66 = arith.constant 5.000000e-01 : f32
    %153 = vector.broadcast %cst_66 : f32 to vector<8x128xf32>
    %154 = arith.mulf %153, %152 : vector<8x128xf32>
    %155 = math.tanh %154 : vector<8x128xf32>
    %cst_67 = arith.constant 5.000000e-01 : f32
    %156 = vector.broadcast %cst_67 : f32 to vector<8x128xf32>
    %157 = arith.mulf %156, %155 : vector<8x128xf32>
    %cst_68 = arith.constant 5.000000e-01 : f32
    %158 = vector.broadcast %cst_68 : f32 to vector<8x128xf32>
    %159 = arith.addf %157, %158 : vector<8x128xf32>
    %160 = arith.mulf %149, %124 : vector<8x128xf32>
    %161 = arith.mulf %141, %151 : vector<8x128xf32>
    %162 = arith.addf %160, %161 : vector<8x128xf32>
    %163 = math.tanh %162 : vector<8x128xf32>
    %164 = arith.mulf %159, %163 : vector<8x128xf32>
    %c4_i32 = arith.constant 4 : i32
    %c8_i32_69 = arith.constant 8 : i32
    %165 = arith.muli %c4_i32, %c8_i32_69 : i32
    %166 = tpu.assume_multiple %165, 8 : i32
    %167 = arith.index_cast %166 : i32 to index
    %c0_70 = arith.constant 0 : index
    %168 = vector.load %arg9[%167, %c0_70] : memref<64x512xf32, #tpu.memory_space<vmem>>, vector<8x512xf32>
    %c0_71 = arith.constant 0 : index
    %c0_72 = arith.constant 0 : index
    %169 = vector.load %arg4[%c0_71, %c0_72] : memref<128x512xf32, #tpu.memory_space<vmem>>, vector<128x512xf32>
    %cst_73 = arith.constant dense<0.000000e+00> : vector<8x512xf32>
    %170 = tpu.matmul %164, %169, %cst_73 {dimension_numbers = #tpu.dot_dimension_numbers<[1], [0], [0], [1], [0, 0, 1, 1], [], []>} : vector<8x128xf32>, vector<128x512xf32>, vector<8x512xf32> -> vector<8x512xf32>
    %171 = arith.addf %168, %170 : vector<8x512xf32>
    %172 = vector.extract_strided_slice %171 {offsets = [0, 0], sizes = [8, 128], strides = [1, 1]} : vector<8x512xf32> to vector<8x128xf32>
    %cst_74 = arith.constant 5.000000e-01 : f32
    %173 = vector.broadcast %cst_74 : f32 to vector<8x128xf32>
    %174 = arith.mulf %173, %172 : vector<8x128xf32>
    %175 = math.tanh %174 : vector<8x128xf32>
    %cst_75 = arith.constant 5.000000e-01 : f32
    %176 = vector.broadcast %cst_75 : f32 to vector<8x128xf32>
    %177 = arith.mulf %176, %175 : vector<8x128xf32>
    %cst_76 = arith.constant 5.000000e-01 : f32
    %178 = vector.broadcast %cst_76 : f32 to vector<8x128xf32>
    %179 = arith.addf %177, %178 : vector<8x128xf32>
    %180 = vector.extract_strided_slice %171 {offsets = [0, 128], sizes = [8, 128], strides = [1, 1]} : vector<8x512xf32> to vector<8x128xf32>
    %cst_77 = arith.constant 5.000000e-01 : f32
    %181 = vector.broadcast %cst_77 : f32 to vector<8x128xf32>
    %182 = arith.mulf %181, %180 : vector<8x128xf32>
    %183 = math.tanh %182 : vector<8x128xf32>
    %cst_78 = arith.constant 5.000000e-01 : f32
    %184 = vector.broadcast %cst_78 : f32 to vector<8x128xf32>
    %185 = arith.mulf %184, %183 : vector<8x128xf32>
    %cst_79 = arith.constant 5.000000e-01 : f32
    %186 = vector.broadcast %cst_79 : f32 to vector<8x128xf32>
    %187 = arith.addf %185, %186 : vector<8x128xf32>
    %188 = vector.extract_strided_slice %171 {offsets = [0, 256], sizes = [8, 128], strides = [1, 1]} : vector<8x512xf32> to vector<8x128xf32>
    %189 = math.tanh %188 : vector<8x128xf32>
    %190 = vector.extract_strided_slice %171 {offsets = [0, 384], sizes = [8, 128], strides = [1, 1]} : vector<8x512xf32> to vector<8x128xf32>
    %cst_80 = arith.constant 5.000000e-01 : f32
    %191 = vector.broadcast %cst_80 : f32 to vector<8x128xf32>
    %192 = arith.mulf %191, %190 : vector<8x128xf32>
    %193 = math.tanh %192 : vector<8x128xf32>
    %cst_81 = arith.constant 5.000000e-01 : f32
    %194 = vector.broadcast %cst_81 : f32 to vector<8x128xf32>
    %195 = arith.mulf %194, %193 : vector<8x128xf32>
    %cst_82 = arith.constant 5.000000e-01 : f32
    %196 = vector.broadcast %cst_82 : f32 to vector<8x128xf32>
    %197 = arith.addf %195, %196 : vector<8x128xf32>
    %198 = arith.mulf %187, %162 : vector<8x128xf32>
    %199 = arith.mulf %179, %189 : vector<8x128xf32>
    %200 = arith.addf %198, %199 : vector<8x128xf32>
    %201 = math.tanh %200 : vector<8x128xf32>
    %202 = arith.mulf %197, %201 : vector<8x128xf32>
    %c5_i32 = arith.constant 5 : i32
    %c8_i32_83 = arith.constant 8 : i32
    %203 = arith.muli %c5_i32, %c8_i32_83 : i32
    %204 = tpu.assume_multiple %203, 8 : i32
    %205 = arith.index_cast %204 : i32 to index
    %c0_84 = arith.constant 0 : index
    %206 = vector.load %arg9[%205, %c0_84] : memref<64x512xf32, #tpu.memory_space<vmem>>, vector<8x512xf32>
    %c0_85 = arith.constant 0 : index
    %c0_86 = arith.constant 0 : index
    %207 = vector.load %arg4[%c0_85, %c0_86] : memref<128x512xf32, #tpu.memory_space<vmem>>, vector<128x512xf32>
    %cst_87 = arith.constant dense<0.000000e+00> : vector<8x512xf32>
    %208 = tpu.matmul %202, %207, %cst_87 {dimension_numbers = #tpu.dot_dimension_numbers<[1], [0], [0], [1], [0, 0, 1, 1], [], []>} : vector<8x128xf32>, vector<128x512xf32>, vector<8x512xf32> -> vector<8x512xf32>
    %209 = arith.addf %206, %208 : vector<8x512xf32>
    %210 = vector.extract_strided_slice %209 {offsets = [0, 0], sizes = [8, 128], strides = [1, 1]} : vector<8x512xf32> to vector<8x128xf32>
    %cst_88 = arith.constant 5.000000e-01 : f32
    %211 = vector.broadcast %cst_88 : f32 to vector<8x128xf32>
    %212 = arith.mulf %211, %210 : vector<8x128xf32>
    %213 = math.tanh %212 : vector<8x128xf32>
    %cst_89 = arith.constant 5.000000e-01 : f32
    %214 = vector.broadcast %cst_89 : f32 to vector<8x128xf32>
    %215 = arith.mulf %214, %213 : vector<8x128xf32>
    %cst_90 = arith.constant 5.000000e-01 : f32
    %216 = vector.broadcast %cst_90 : f32 to vector<8x128xf32>
    %217 = arith.addf %215, %216 : vector<8x128xf32>
    %218 = vector.extract_strided_slice %209 {offsets = [0, 128], sizes = [8, 128], strides = [1, 1]} : vector<8x512xf32> to vector<8x128xf32>
    %cst_91 = arith.constant 5.000000e-01 : f32
    %219 = vector.broadcast %cst_91 : f32 to vector<8x128xf32>
    %220 = arith.mulf %219, %218 : vector<8x128xf32>
    %221 = math.tanh %220 : vector<8x128xf32>
    %cst_92 = arith.constant 5.000000e-01 : f32
    %222 = vector.broadcast %cst_92 : f32 to vector<8x128xf32>
    %223 = arith.mulf %222, %221 : vector<8x128xf32>
    %cst_93 = arith.constant 5.000000e-01 : f32
    %224 = vector.broadcast %cst_93 : f32 to vector<8x128xf32>
    %225 = arith.addf %223, %224 : vector<8x128xf32>
    %226 = vector.extract_strided_slice %209 {offsets = [0, 256], sizes = [8, 128], strides = [1, 1]} : vector<8x512xf32> to vector<8x128xf32>
    %227 = math.tanh %226 : vector<8x128xf32>
    %228 = vector.extract_strided_slice %209 {offsets = [0, 384], sizes = [8, 128], strides = [1, 1]} : vector<8x512xf32> to vector<8x128xf32>
    %cst_94 = arith.constant 5.000000e-01 : f32
    %229 = vector.broadcast %cst_94 : f32 to vector<8x128xf32>
    %230 = arith.mulf %229, %228 : vector<8x128xf32>
    %231 = math.tanh %230 : vector<8x128xf32>
    %cst_95 = arith.constant 5.000000e-01 : f32
    %232 = vector.broadcast %cst_95 : f32 to vector<8x128xf32>
    %233 = arith.mulf %232, %231 : vector<8x128xf32>
    %cst_96 = arith.constant 5.000000e-01 : f32
    %234 = vector.broadcast %cst_96 : f32 to vector<8x128xf32>
    %235 = arith.addf %233, %234 : vector<8x128xf32>
    %236 = arith.mulf %225, %200 : vector<8x128xf32>
    %237 = arith.mulf %217, %227 : vector<8x128xf32>
    %238 = arith.addf %236, %237 : vector<8x128xf32>
    %239 = math.tanh %238 : vector<8x128xf32>
    %240 = arith.mulf %235, %239 : vector<8x128xf32>
    %c6_i32 = arith.constant 6 : i32
    %c8_i32_97 = arith.constant 8 : i32
    %241 = arith.muli %c6_i32, %c8_i32_97 : i32
    %242 = tpu.assume_multiple %241, 8 : i32
    %243 = arith.index_cast %242 : i32 to index
    %c0_98 = arith.constant 0 : index
    %244 = vector.load %arg9[%243, %c0_98] : memref<64x512xf32, #tpu.memory_space<vmem>>, vector<8x512xf32>
    %c0_99 = arith.constant 0 : index
    %c0_100 = arith.constant 0 : index
    %245 = vector.load %arg4[%c0_99, %c0_100] : memref<128x512xf32, #tpu.memory_space<vmem>>, vector<128x512xf32>
    %cst_101 = arith.constant dense<0.000000e+00> : vector<8x512xf32>
    %246 = tpu.matmul %240, %245, %cst_101 {dimension_numbers = #tpu.dot_dimension_numbers<[1], [0], [0], [1], [0, 0, 1, 1], [], []>} : vector<8x128xf32>, vector<128x512xf32>, vector<8x512xf32> -> vector<8x512xf32>
    %247 = arith.addf %244, %246 : vector<8x512xf32>
    %248 = vector.extract_strided_slice %247 {offsets = [0, 0], sizes = [8, 128], strides = [1, 1]} : vector<8x512xf32> to vector<8x128xf32>
    %cst_102 = arith.constant 5.000000e-01 : f32
    %249 = vector.broadcast %cst_102 : f32 to vector<8x128xf32>
    %250 = arith.mulf %249, %248 : vector<8x128xf32>
    %251 = math.tanh %250 : vector<8x128xf32>
    %cst_103 = arith.constant 5.000000e-01 : f32
    %252 = vector.broadcast %cst_103 : f32 to vector<8x128xf32>
    %253 = arith.mulf %252, %251 : vector<8x128xf32>
    %cst_104 = arith.constant 5.000000e-01 : f32
    %254 = vector.broadcast %cst_104 : f32 to vector<8x128xf32>
    %255 = arith.addf %253, %254 : vector<8x128xf32>
    %256 = vector.extract_strided_slice %247 {offsets = [0, 128], sizes = [8, 128], strides = [1, 1]} : vector<8x512xf32> to vector<8x128xf32>
    %cst_105 = arith.constant 5.000000e-01 : f32
    %257 = vector.broadcast %cst_105 : f32 to vector<8x128xf32>
    %258 = arith.mulf %257, %256 : vector<8x128xf32>
    %259 = math.tanh %258 : vector<8x128xf32>
    %cst_106 = arith.constant 5.000000e-01 : f32
    %260 = vector.broadcast %cst_106 : f32 to vector<8x128xf32>
    %261 = arith.mulf %260, %259 : vector<8x128xf32>
    %cst_107 = arith.constant 5.000000e-01 : f32
    %262 = vector.broadcast %cst_107 : f32 to vector<8x128xf32>
    %263 = arith.addf %261, %262 : vector<8x128xf32>
    %264 = vector.extract_strided_slice %247 {offsets = [0, 256], sizes = [8, 128], strides = [1, 1]} : vector<8x512xf32> to vector<8x128xf32>
    %265 = math.tanh %264 : vector<8x128xf32>
    %266 = vector.extract_strided_slice %247 {offsets = [0, 384], sizes = [8, 128], strides = [1, 1]} : vector<8x512xf32> to vector<8x128xf32>
    %cst_108 = arith.constant 5.000000e-01 : f32
    %267 = vector.broadcast %cst_108 : f32 to vector<8x128xf32>
    %268 = arith.mulf %267, %266 : vector<8x128xf32>
    %269 = math.tanh %268 : vector<8x128xf32>
    %cst_109 = arith.constant 5.000000e-01 : f32
    %270 = vector.broadcast %cst_109 : f32 to vector<8x128xf32>
    %271 = arith.mulf %270, %269 : vector<8x128xf32>
    %cst_110 = arith.constant 5.000000e-01 : f32
    %272 = vector.broadcast %cst_110 : f32 to vector<8x128xf32>
    %273 = arith.addf %271, %272 : vector<8x128xf32>
    %274 = arith.mulf %263, %238 : vector<8x128xf32>
    %275 = arith.mulf %255, %265 : vector<8x128xf32>
    %276 = arith.addf %274, %275 : vector<8x128xf32>
    %277 = math.tanh %276 : vector<8x128xf32>
    %278 = arith.mulf %273, %277 : vector<8x128xf32>
    %c7_i32 = arith.constant 7 : i32
    %c8_i32_111 = arith.constant 8 : i32
    %279 = arith.muli %c7_i32, %c8_i32_111 : i32
    %280 = tpu.assume_multiple %279, 8 : i32
    %281 = arith.index_cast %280 : i32 to index
    %c0_112 = arith.constant 0 : index
    %282 = vector.load %arg9[%281, %c0_112] : memref<64x512xf32, #tpu.memory_space<vmem>>, vector<8x512xf32>
    %c0_113 = arith.constant 0 : index
    %c0_114 = arith.constant 0 : index
    %283 = vector.load %arg4[%c0_113, %c0_114] : memref<128x512xf32, #tpu.memory_space<vmem>>, vector<128x512xf32>
    %cst_115 = arith.constant dense<0.000000e+00> : vector<8x512xf32>
    %284 = tpu.matmul %278, %283, %cst_115 {dimension_numbers = #tpu.dot_dimension_numbers<[1], [0], [0], [1], [0, 0, 1, 1], [], []>} : vector<8x128xf32>, vector<128x512xf32>, vector<8x512xf32> -> vector<8x512xf32>
    %285 = arith.addf %282, %284 : vector<8x512xf32>
    %286 = vector.extract_strided_slice %285 {offsets = [0, 0], sizes = [8, 128], strides = [1, 1]} : vector<8x512xf32> to vector<8x128xf32>
    %cst_116 = arith.constant 5.000000e-01 : f32
    %287 = vector.broadcast %cst_116 : f32 to vector<8x128xf32>
    %288 = arith.mulf %287, %286 : vector<8x128xf32>
    %289 = math.tanh %288 : vector<8x128xf32>
    %cst_117 = arith.constant 5.000000e-01 : f32
    %290 = vector.broadcast %cst_117 : f32 to vector<8x128xf32>
    %291 = arith.mulf %290, %289 : vector<8x128xf32>
    %cst_118 = arith.constant 5.000000e-01 : f32
    %292 = vector.broadcast %cst_118 : f32 to vector<8x128xf32>
    %293 = arith.addf %291, %292 : vector<8x128xf32>
    %294 = vector.extract_strided_slice %285 {offsets = [0, 128], sizes = [8, 128], strides = [1, 1]} : vector<8x512xf32> to vector<8x128xf32>
    %cst_119 = arith.constant 5.000000e-01 : f32
    %295 = vector.broadcast %cst_119 : f32 to vector<8x128xf32>
    %296 = arith.mulf %295, %294 : vector<8x128xf32>
    %297 = math.tanh %296 : vector<8x128xf32>
    %cst_120 = arith.constant 5.000000e-01 : f32
    %298 = vector.broadcast %cst_120 : f32 to vector<8x128xf32>
    %299 = arith.mulf %298, %297 : vector<8x128xf32>
    %cst_121 = arith.constant 5.000000e-01 : f32
    %300 = vector.broadcast %cst_121 : f32 to vector<8x128xf32>
    %301 = arith.addf %299, %300 : vector<8x128xf32>
    %302 = vector.extract_strided_slice %285 {offsets = [0, 256], sizes = [8, 128], strides = [1, 1]} : vector<8x512xf32> to vector<8x128xf32>
    %303 = math.tanh %302 : vector<8x128xf32>
    %304 = vector.extract_strided_slice %285 {offsets = [0, 384], sizes = [8, 128], strides = [1, 1]} : vector<8x512xf32> to vector<8x128xf32>
    %cst_122 = arith.constant 5.000000e-01 : f32
    %305 = vector.broadcast %cst_122 : f32 to vector<8x128xf32>
    %306 = arith.mulf %305, %304 : vector<8x128xf32>
    %307 = math.tanh %306 : vector<8x128xf32>
    %cst_123 = arith.constant 5.000000e-01 : f32
    %308 = vector.broadcast %cst_123 : f32 to vector<8x128xf32>
    %309 = arith.mulf %308, %307 : vector<8x128xf32>
    %cst_124 = arith.constant 5.000000e-01 : f32
    %310 = vector.broadcast %cst_124 : f32 to vector<8x128xf32>
    %311 = arith.addf %309, %310 : vector<8x128xf32>
    %312 = arith.mulf %301, %276 : vector<8x128xf32>
    %313 = arith.mulf %293, %303 : vector<8x128xf32>
    %314 = arith.addf %312, %313 : vector<8x128xf32>
    %315 = math.tanh %314 : vector<8x128xf32>
    %316 = arith.mulf %311, %315 : vector<8x128xf32>
    %c8_i32_125 = arith.constant 8 : i32
    %c0_126 = arith.constant 0 : index
    %c0_127 = arith.constant 0 : index
    %317 = vector.load %arg10[%c0_126, %c0_127] : memref<8x128xf32, #tpu.memory_space<vmem>>, vector<8x128xf32>
    tpu.vector_store %arg10[%c0_126, %c0_127], %316 {strides = array<i32>} : memref<8x128xf32, #tpu.memory_space<vmem>>, vector<8x128xf32>,
    %c0_128 = arith.constant 0 : index
    %c0_129 = arith.constant 0 : index
    %318 = vector.load %arg11[%c0_128, %c0_129] : memref<8x128xf32, #tpu.memory_space<vmem>>, vector<8x128xf32>
    tpu.vector_store %arg11[%c0_128, %c0_129], %314 {strides = array<i32>} : memref<8x128xf32, #tpu.memory_space<vmem>>, vector<8x128xf32>,
    %c0_i32_130 = arith.constant 0 : i32
    %319 = arith.cmpi eq, %arg1, %c0_i32_130 : i32
    %320 = arith.extui %319 : i1 to i32
    %c0_i32_131 = arith.constant 0 : i32
    %321 = arith.cmpi ne, %320, %c0_i32_131 : i32
    scf.if %321 {
      %c0_132 = arith.constant 0 : index
      %c0_133 = arith.constant 0 : index
      %322 = vector.load %arg6[%c0_132, %c0_133] : memref<1x128xf32, #tpu.memory_space<vmem>>, vector<1x128xf32>
      %323 = vector.broadcast %322 : vector<1x128xf32> to vector<8x128xf32>
      %324 = arith.mulf %316, %323 : vector<8x128xf32>
      %cst_134 = arith.constant dense<0.000000e+00> : vector<8xf32>
      %325 = vector.multi_reduction <add>, %324, %cst_134 [1] : vector<8x128xf32> to vector<8xf32>
      %326 = vector.shape_cast %325 : vector<8xf32> to vector<1x8xf32>
      %c0_135 = arith.constant 0 : index
      %c0_136 = arith.constant 0 : index
      %327 = vector.load %arg7[%c0_135, %c0_136] : memref<1x1xf32, #tpu.memory_space<vmem>>, vector<1x1xf32>
      %328 = vector.broadcast %327 : vector<1x1xf32> to vector<1x8xf32>
      %329 = arith.addf %326, %328 : vector<1x8xf32>
      %c0_137 = arith.constant 0 : index
      %c0_138 = arith.constant 0 : index
      %c0_139 = arith.constant 0 : index
      %330 = vector.load %arg8[%c0_137, %c0_138, %c0_139] : memref<1x1x8xf32, #tpu.memory_space<vmem>>, vector<1x1x8xf32>
      %331 = vector.shape_cast %330 : vector<1x1x8xf32> to vector<1x8xf32>
      %332 = vector.shape_cast %329 : vector<1x8xf32> to vector<1x1x8xf32>
      tpu.vector_store %arg8[%c0_137, %c0_138, %c0_139], %332 {strides = array<i32>} : memref<1x1x8xf32, #tpu.memory_space<vmem>>, vector<1x1x8xf32>,
    } else {
    }
    return
  }
  func.func @transform_0(%arg0: i32, %arg1: i32) -> (i32, i32, i32) {
    %c0_i32 = arith.constant 0 : i32
    %c0_i32_0 = arith.constant 0 : i32
    return %arg0, %arg1, %c0_i32 : i32, i32, i32
  }
  func.func @transform_1(%arg0: i32, %arg1: i32) -> (i32, i32) {
    %c0_i32 = arith.constant 0 : i32
    %c0_i32_0 = arith.constant 0 : i32
    %c0_i32_1 = arith.constant 0 : i32
    return %c0_i32, %c0_i32_0 : i32, i32
  }
  func.func @transform_2(%arg0: i32, %arg1: i32) -> (i32, i32) {
    %c0_i32 = arith.constant 0 : i32
    %c0_i32_0 = arith.constant 0 : i32
    %c0_i32_1 = arith.constant 0 : i32
    return %c0_i32, %c0_i32_0 : i32, i32
  }
  func.func @transform_3(%arg0: i32, %arg1: i32) -> (i32, i32) {
    %c0_i32 = arith.constant 0 : i32
    %c0_i32_0 = arith.constant 0 : i32
    %c0_i32_1 = arith.constant 0 : i32
    return %c0_i32, %c0_i32_0 : i32, i32
  }
  func.func @transform_4(%arg0: i32, %arg1: i32) -> (i32, i32) {
    %c0_i32 = arith.constant 0 : i32
    %c0_i32_0 = arith.constant 0 : i32
    %c0_i32_1 = arith.constant 0 : i32
    return %c0_i32, %c0_i32_0 : i32, i32
  }
  func.func @transform_5(%arg0: i32, %arg1: i32) -> (i32, i32) {
    %c0_i32 = arith.constant 0 : i32
    %c0_i32_0 = arith.constant 0 : i32
    %c0_i32_1 = arith.constant 0 : i32
    return %c0_i32, %c0_i32_0 : i32, i32
  }
  func.func @transform_6(%arg0: i32, %arg1: i32) -> (i32, i32, i32) {
    %c0_i32 = arith.constant 0 : i32
    %c0_i32_0 = arith.constant 0 : i32
    %c0_i32_1 = arith.constant 0 : i32
    return %arg0, %c0_i32, %c0_i32_0 : i32, i32, i32
  }
}

</mosaic_0001>

<llo_original>
// kernel: tpu_custom_call.1
$region0: #{tpu_custom_call.1}
  #allocation0 [shape = 'u32[]', space=smem, size = 0x4, offset = 0x4, fixed_abs, tag = 'smem constant byte address 0x4 - core index']
  #allocation1 [shape = 'u32[144,128]{1,0:T(1,128)}', space=vmem, size = 0x12000, scoped, tag = 'internal scratch']
  #allocation2 [shape = 'f32[64,512]{1,0:T(8,128)}', space=vmem, size = 0x20000, scoped, tag = 'scratch operand']
  #allocation3 [shape = 'f32[8,128]{1,0:T(8,128)}', space=vmem, size = 0x1000, scoped, tag = 'scratch operand']
  #allocation4 [shape = 'f32[8,128]{1,0:T(8,128)}', space=vmem, size = 0x1000, scoped, tag = 'scratch operand']
  #allocation5 [shape = 'f32[1,1]{1,0:T(1,128)S(1)}', space=vmem, size = 0x200, scoped, tag = 'scoped memory for tpu_custom_call.1']
  %s0 = inlined_call_operand.vmem [shape: f32[1,64,32], index: 0, kind: input, shape index: {}]
  %s1 = inlined_call_operand.hbm [shape: f32[32,512], index: 1, kind: input, shape index: {}]
  %s2 = inlined_call_operand.hbm [shape: f32[128,512], index: 2, kind: input, shape index: {}]
  %s3 = inlined_call_operand.vmem [shape: f32[1,512], index: 3, kind: input, shape index: {}]
  %s4 = inlined_call_operand.vmem [shape: f32[1,128], index: 4, kind: input, shape index: {}]
  %s5 = inlined_call_operand.<no memory space> [shape: f32[1,1], index: 5, kind: input, shape index: {}]
  %s6 = inlined_call_operand.hbm [shape: f32[1,1,8], index: 6, kind: output, shape index: {}]
  %s7 = sld [smem:[#allocation0]]
  $region50: #{tpu_custom_call.1} parent=0
    _
  %s9 = ssub.s32 1, %s7
  %s10 = scalar_select 0, %s9, %s7
  %v11 = vstv %s5
  %12 = vst [vmem:[#allocation5] sm:$0x1] %v11
  $region1: #{tpu_custom_call.1} parent=0
    #allocation6 [shape = 'u8[65536]{0}', space=vmem, size = 0x10000, scoped, tag = 'input window, operand 1, single buffered']
    #allocation7 [shape = 's32[1]{0}', space=sflag, size = 0x4, scoped, tag = 'scoped memory for tpu_custom_call.1']
    #allocation8 [shape = 's32[1]{0}', space=sflag, size = 0x4, scoped, tag = 'scoped memory for tpu_custom_call.1']
    #allocation9 [shape = 'u8[262144]{0}', space=vmem, size = 0x40000, scoped, tag = 'input window, operand 2, single buffered']
    #allocation10 [shape = 's32[1]{0}', space=sflag, size = 0x4, scoped, tag = 'scoped memory for tpu_custom_call.1']
    #allocation11 [shape = 'u8[512]{0}', space=vmem, size = 0x400, scoped, tag = 'output window, operand 0, single buffered']
    %13 = vsyncpa [#allocation7], 0
    %14 = vsyncpa [#allocation10], 0
    %15 = vsyncpa [#allocation8], 0
    // Predicated region
    $region2: #{tpu_custom_call.1} parent=1 // pred_check
      _
    $region3: #{tpu_custom_call.1} parent=1 // pred_check_branch
      %17 = sbr.rel (0) target = $region5
    $region4: #{tpu_custom_call.1} parent=1 // pred_region
      _
    $region5: #{tpu_custom_call.1} parent=1 // pred_fallthru
      _
    // Predicated region
    $region6: #{tpu_custom_call.1} parent=1 // pred_check
      _
    $region7: #{tpu_custom_call.1} parent=1 // pred_check_branch
      %19 = sbr.rel (0) target = $region9
    $region8: #{tpu_custom_call.1} parent=1 // pred_region
      %s21 = ssub.s32 2048, 2048
      %22 = vsyncadd [#allocation7], %s21
      %s23 = sshll.u32 [#allocation6], 4
      %s24 = int_to_ptr.vmem [resolvable:$true] %s23
      %29 = dma.hbm_to_vmem [thread:$0]  %s1, 2048, %s24, [#allocation7], 512, 512, 32
    $region9: #{tpu_custom_call.1} parent=1 // pred_fallthru
      _
    // Predicated region
    $region10: #{tpu_custom_call.1} parent=1 // pred_check
      _
    $region11: #{tpu_custom_call.1} parent=1 // pred_check_branch
      %31 = sbr.rel (0) target = $region13
    $region12: #{tpu_custom_call.1} parent=1 // pred_region
      %s33 = ssub.s32 8192, 8192
      %34 = vsyncadd [#allocation10], %s33
      %s35 = sshll.u32 [#allocation9], 4
      %s36 = int_to_ptr.vmem [resolvable:$true] %s35
      %41 = dma.hbm_to_vmem [thread:$0]  %s2, 8192, %s36, [#allocation10], 512, 512, 32
    $region13: #{tpu_custom_call.1} parent=1 // pred_fallthru
      _
    // Predicated region
    $region14: #{tpu_custom_call.1} parent=1 // pred_check
      _
    $region15: #{tpu_custom_call.1} parent=1 // pred_check_branch
      %43 = sbr.rel (0) target = $region17
    $region16: #{tpu_custom_call.1} parent=1 // pred_region
      _
    $region17: #{tpu_custom_call.1} parent=1 // pred_fallthru
      _
    // Predicated region
    $region18: #{tpu_custom_call.1} parent=1 // pred_check
      _
    $region19: #{tpu_custom_call.1} parent=1 // pred_check_branch
      %45 = sbr.rel (0) target = $region21
    $region20: #{tpu_custom_call.1} parent=1 // pred_region
      _
    $region21: #{tpu_custom_call.1} parent=1 // pred_fallthru
      _
    // Predicated region
    $region22: #{tpu_custom_call.1} parent=1 // pred_check
      _
    $region23: #{tpu_custom_call.1} parent=1 // pred_check_branch
      %47 = sbr.rel (0) target = $region25
    $region24: #{tpu_custom_call.1} parent=1 // pred_region
      _
    $region25: #{tpu_custom_call.1} parent=1 // pred_fallthru
      _
    // Predicated region
    $region26: #{tpu_custom_call.1} parent=1 // pred_check
      _
    $region27: #{tpu_custom_call.1} parent=1 // pred_check_branch
      %49 = sbr.rel (0) target = $region29
    $region28: #{tpu_custom_call.1} parent=1 // pred_region
      %50 = dma.done [#allocation7], 2048
    $region29: #{tpu_custom_call.1} parent=1 // pred_fallthru
      _
    // Predicated region
    $region30: #{tpu_custom_call.1} parent=1 // pred_check
      _
    $region31: #{tpu_custom_call.1} parent=1 // pred_check_branch
      %52 = sbr.rel (0) target = $region33
    $region32: #{tpu_custom_call.1} parent=1 // pred_region
      %53 = dma.done [#allocation10], 8192
    $region33: #{tpu_custom_call.1} parent=1 // pred_fallthru
      _
    %p54 = scmp.eq.s32.totalorder 0, 0
    // Predicated region
    $region34: #{tpu_custom_call.1} parent=1 // pred_check
      %p55 = pneg %p54
    $region35: #{tpu_custom_call.1} parent=1 // pred_check_branch
      %57 = sbr.rel (%p55) target = $region37
    $region36: #{tpu_custom_call.1} parent=1 // pred_region
      %58 = vst [vmem:[#allocation3] sm:$0xff] 0.0
      %59 = vst [vmem:[#allocation4] sm:$0xff] 0.0
    $region37: #{tpu_custom_call.1} parent=1 // pred_fallthru
      _
    %v60 = vld [vmem:[%s0] sm:$0xff]
    %v61 = vld [vmem:[%s0 + $0x8] sm:$0xff]
    %v62 = vld [vmem:[%s0 + $0x10] sm:$0xff]
    %v63 = vld [vmem:[%s0 + $0x18] sm:$0xff]
    %v64 = vld [vmem:[%s0 + $0x20] sm:$0xff]
    %v65 = vld [vmem:[%s0 + $0x28] sm:$0xff]
    %v66 = vld [vmem:[%s0 + $0x30] sm:$0xff]
    %v67 = vld [vmem:[%s0 + $0x38] sm:$0xff]
    %v68 = vld [vmem:[#allocation6] sm:$0xff]
    %v69 = vld [vmem:[#allocation6 + $0x8] sm:$0xff]
    %v70 = vld [vmem:[#allocation6 + $0x10] sm:$0xff]
    %v71 = vld [vmem:[#allocation6 + $0x18] sm:$0xff]
    %v72 = vld [vmem:[#allocation6 + $0x20] sm:$0xff]
    %v73 = vld [vmem:[#allocation6 + $0x28] sm:$0xff]
    %v74 = vld [vmem:[#allocation6 + $0x30] sm:$0xff]
    %v75 = vld [vmem:[#allocation6 + $0x38] sm:$0xff]
    %v76 = vld [vmem:[#allocation6 + $0x40] sm:$0xff]
    %v77 = vld [vmem:[#allocation6 + $0x48] sm:$0xff]
    %v78 = vld [vmem:[#allocation6 + $0x50] sm:$0xff]
    %v79 = vld [vmem:[#allocation6 + $0x58] sm:$0xff]
    %v80 = vld [vmem:[#allocation6 + $0x60] sm:$0xff]
    %v81 = vld [vmem:[#allocation6 + $0x68] sm:$0xff]
    %v82 = vld [vmem:[#allocation6 + $0x70] sm:$0xff]
    %v83 = vld [vmem:[#allocation6 + $0x78] sm:$0xff]
    %v84 = vld [vmem:[%s3] sm:$0xf]
    %v86 = vlaneseq
    %v87 = vshrl.u32 %v86, 7
    %v88 = vsub.s32 0, %v87
    %v89 = vrot.slane %v84, %v88
    %v90 = vlaneseq
    %v91 = vshrl.u32 %v90, 7
    %v92 = vsub.s32 1, %v91
    %v93 = vrot.slane %v84, %v92
    %v94 = vlaneseq
    %v95 = vshrl.u32 %v94, 7
    %v96 = vsub.s32 2, %v95
    %v97 = vrot.slane %v84, %v96
    %v98 = vlaneseq
    %v99 = vshrl.u32 %v98, 7
    %v100 = vsub.s32 3, %v99
    %v101 = vrot.slane %v84, %v100
    %vm106 = vcmask 261120
    %v108 = vsel %vm106, %v60, 0
    %v111 = vsel %vm106, %v61, 0
    %v114 = vsel %vm106, %v62, 0
    %v117 = vsel %vm106, %v63, 0
    %v120 = vsel %vm106, %v64, 0
    %v123 = vsel %vm106, %v65, 0
    %v126 = vsel %vm106, %v66, 0
    %v129 = vsel %vm106, %v67, 0
    %131 = vmatprep.subr.mxu0 %v69
    %132 = vmatpush1.msra.mxu0 %v68
    %133 = vmatprep.subr.mxu0 %v73
    %134 = vmatpush1.msra.mxu0 %v72
    %135 = vmatprep.subr.mxu0 %v77
    %136 = vmatpush1.msra.mxu0 %v76
    %137 = vmatprep.subr.mxu0 %v81
    %138 = vmatpush1.msra.mxu0 %v80
    %139 = vmatprep.subr.mxu0 0.0
    %140 = vmatpush1.msra.mxu0 0.0
    %141 = vmatprep.subr.mxu0 0.0
    %142 = vmatpush1.msra.mxu0 0.0
    %143 = vmatprep.subr.mxu0 0.0
    %144 = vmatpush1.msra.mxu0 0.0
    %145 = vmatprep.subr.mxu0 0.0
    %146 = vmatpush1.msra.mxu0 0.0
    %147 = vmatprep.subr.mxu0 0.0
    %148 = vmatpush1.msra.mxu0 0.0
    %149 = vmatprep.subr.mxu0 0.0
    %150 = vmatpush1.msra.mxu0 0.0
    %151 = vmatprep.subr.mxu0 0.0
    %152 = vmatpush1.msra.mxu0 0.0
    %153 = vmatprep.subr.mxu0 0.0
    %154 = vmatpush1.msra.mxu0 0.0
    %155 = vmatprep.subr.mxu0 0.0
    %156 = vmatpush1.msra.mxu0 0.0
    %157 = vmatprep.subr.mxu0 0.0
    %158 = vmatpush1.msra.mxu0 0.0
    %159 = vmatprep.subr.mxu0 0.0
    %160 = vmatpush1.msra.mxu0 0.0
    %161 = vmatprep.subr.mxu0 0.0
    %162 = vmatpush1.msra.mxu0 0.0
    %163 = vmatprep.subr.mxu0 0.0
    %164 = vmatpush1.msra.mxu0 0.0
    %165 = vmatprep.subr.mxu0 0.0
    %166 = vmatpush1.msra.mxu0 0.0
    %167 = vmatprep.subr.mxu0 0.0
    %168 = vmatpush1.msra.mxu0 0.0
    %169 = vmatprep.subr.mxu0 0.0
    %170 = vmatpush1.msra.mxu0 0.0
    %171 = vmatprep.subr.mxu0 0.0
    %172 = vmatpush1.msra.mxu0 0.0
    %173 = vmatprep.subr.mxu0 0.0
    %174 = vmatpush1.msra.mxu0 0.0
    %175 = vmatprep.subr.mxu0 0.0
    %176 = vmatpush1.msra.mxu0 0.0
    %177 = vmatprep.subr.mxu0 0.0
    %178 = vmatpush1.msra.mxu0 0.0
    %179 = vmatprep.subr.mxu0 0.0
    %180 = vmatpush1.msra.mxu0 0.0
    %181 = vmatprep.subr.mxu0 0.0
    %182 = vmatpush1.msra.mxu0 0.0
    %183 = vmatprep.subr.mxu0 0.0
    %184 = vmatpush1.msra.mxu0 0.0
    %185 = vmatprep.subr.mxu0 0.0
    %186 = vmatpush1.msra.mxu0 0.0
    %187 = vmatprep.subr.mxu0 0.0
    %188 = vmatpush1.msra.mxu0 0.0
    %189 = vmatprep.subr.mxu0 0.0
    %190 = vmatpush1.msra.mxu0 0.0
    %191 = vmatprep.subr.mxu0 0.0
    %192 = vmatpush1.msra.mxu0 0.0
    %193 = vmatprep.subr.mxu0 0.0
    %194 = vmatpush1.msra.mxu0 0.0
    %195 = vmatprep.mubr.f32.mxu0 0.0
    %196 = vmatmul.mubr.f32.gmra.mrb[0].mxu0 %v108
    %v197 = vpop.f32.mrb[0].mxu0
    %v198 = vadd.f32 %v89, %v197
    %v199 = vpop.f32.mrb[0].mxu0
    %v200 = vadd.f32 %v93, %v199
    %201 = vmatprep.mubr.f32.mxu0 0.0
    %202 = vmatmul.mubr.f32.gmra.mrb[0].mxu0 %v111
    %v203 = vpop.f32.mrb[0].mxu0
    %v204 = vadd.f32 %v89, %v203
    %v205 = vpop.f32.mrb[0].mxu0
    %v206 = vadd.f32 %v93, %v205
    %207 = vmatprep.mubr.f32.mxu0 0.0
    %208 = vmatmul.mubr.f32.gmra.mrb[0].mxu0 %v114
    %v209 = vpop.f32.mrb[0].mxu0
    %v210 = vadd.f32 %v89, %v209
    %v211 = vpop.f32.mrb[0].mxu0
    %v212 = vadd.f32 %v93, %v211
    %213 = vmatprep.mubr.f32.mxu0 0.0
    %214 = vmatmul.mubr.f32.gmra.mrb[0].mxu0 %v117
    %v215 = vpop.f32.mrb[0].mxu0
    %v216 = vadd.f32 %v89, %v215
    %v217 = vpop.f32.mrb[0].mxu0
    %v218 = vadd.f32 %v93, %v217
    %219 = vmatprep.mubr.f32.mxu0 0.0
    %220 = vmatmul.mubr.f32.gmra.mrb[0].mxu0 %v120
    %v221 = vpop.f32.mrb[0].mxu0
    %v222 = vadd.f32 %v89, %v221
    %v223 = vpop.f32.mrb[0].mxu0
    %v224 = vadd.f32 %v93, %v223
    %225 = vmatprep.mubr.f32.mxu0 0.0
    %226 = vmatmul.mubr.f32.gmra.mrb[0].mxu0 %v123
    %v227 = vpop.f32.mrb[0].mxu0
    %v228 = vadd.f32 %v89, %v227
    %v229 = vpop.f32.mrb[0].mxu0
    %v230 = vadd.f32 %v93, %v229
    %231 = vmatprep.mubr.f32.mxu0 0.0
    %232 = vmatmul.mubr.f32.gmra.mrb[0].mxu0 %v126
    %v233 = vpop.f32.mrb[0].mxu0
    %v234 = vadd.f32 %v89, %v233
    %v235 = vpop.f32.mrb[0].mxu0
    %v236 = vadd.f32 %v93, %v235
    %237 = vmatprep.mubr.f32.mxu0 0.0
    %238 = vmatmul.mubr.f32.gmra.mrb[0].mxu0 %v129
    %v239 = vpop.f32.mrb[0].mxu0
    %v240 = vadd.f32 %v89, %v239
    %v241 = vpop.f32.mrb[0].mxu0
    %v242 = vadd.f32 %v93, %v241
    %243 = vdwg.mxu0
    %244 = vmatprep.subr.mxu0 %v71
    %245 = vmatpush1.msra.mxu0 %v70
    %246 = vmatprep.subr.mxu0 %v75
    %247 = vmatpush1.msra.mxu0 %v74
    %248 = vmatprep.subr.mxu0 %v79
    %249 = vmatpush1.msra.mxu0 %v78
    %250 = vmatprep.subr.mxu0 %v83
    %251 = vmatpush1.msra.mxu0 %v82
    %252 = vmatprep.subr.mxu0 0.0
    %253 = vmatpush1.msra.mxu0 0.0
    %254 = vmatprep.subr.mxu0 0.0
    %255 = vmatpush1.msra.mxu0 0.0
    %256 = vmatprep.subr.mxu0 0.0
    %257 = vmatpush1.msra.mxu0 0.0
    %258 = vmatprep.subr.mxu0 0.0
    %259 = vmatpush1.msra.mxu0 0.0
    %260 = vmatprep.subr.mxu0 0.0
    %261 = vmatpush1.msra.mxu0 0.0
    %262 = vmatprep.subr.mxu0 0.0
    %263 = vmatpush1.msra.mxu0 0.0
    %264 = vmatprep.subr.mxu0 0.0
    %265 = vmatpush1.msra.mxu0 0.0
    %266 = vmatprep.subr.mxu0 0.0
    %267 = vmatpush1.msra.mxu0 0.0
    %268 = vmatprep.subr.mxu0 0.0
    %269 = vmatpush1.msra.mxu0 0.0
    %270 = vmatprep.subr.mxu0 0.0
    %271 = vmatpush1.msra.mxu0 0.0
    %272 = vmatprep.subr.mxu0 0.0
    %273 = vmatpush1.msra.mxu0 0.0
    %274 = vmatprep.subr.mxu0 0.0
    %275 = vmatpush1.msra.mxu0 0.0
    %276 = vmatprep.subr.mxu0 0.0
    %277 = vmatpush1.msra.mxu0 0.0
    %278 = vmatprep.subr.mxu0 0.0
    %279 = vmatpush1.msra.mxu0 0.0
    %280 = vmatprep.subr.mxu0 0.0
    %281 = vmatpush1.msra.mxu0 0.0
    %282 = vmatprep.subr.mxu0 0.0
    %283 = vmatpush1.msra.mxu0 0.0
    %284 = vmatprep.subr.mxu0 0.0
    %285 = vmatpush1.msra.mxu0 0.0
    %286 = vmatprep.subr.mxu0 0.0
    %287 = vmatpush1.msra.mxu0 0.0
    %288 = vmatprep.subr.mxu0 0.0
    %289 = vmatpush1.msra.mxu0 0.0
    %290 = vmatprep.subr.mxu0 0.0
    %291 = vmatpush1.msra.mxu0 0.0
    %292 = vmatprep.subr.mxu0 0.0
    %293 = vmatpush1.msra.mxu0 0.0
    %294 = vmatprep.subr.mxu0 0.0
    %295 = vmatpush1.msra.mxu0 0.0
    %296 = vmatprep.subr.mxu0 0.0
    %297 = vmatpush1.msra.mxu0 0.0
    %298 = vmatprep.subr.mxu0 0.0
    %299 = vmatpush1.msra.mxu0 0.0
    %300 = vmatprep.subr.mxu0 0.0
    %301 = vmatpush1.msra.mxu0 0.0
    %302 = vmatprep.subr.mxu0 0.0
    %303 = vmatpush1.msra.mxu0 0.0
    %304 = vmatprep.subr.mxu0 0.0
    %305 = vmatpush1.msra.mxu0 0.0
    %306 = vmatprep.subr.mxu0 0.0
    %307 = vmatpush1.msra.mxu0 0.0
    %308 = vmatprep.mubr.f32.mxu0 0.0
    %309 = vmatmul.mubr.f32.gmra.mrb[0].mxu0 %v108
    %v310 = vpop.f32.mrb[0].mxu0
    %v311 = vadd.f32 %v97, %v310
    %v312 = vpop.f32.mrb[0].mxu0
    %v313 = vadd.f32 %v101, %v312
    %314 = vmatprep.mubr.f32.mxu0 0.0
    %315 = vmatmul.mubr.f32.gmra.mrb[0].mxu0 %v111
    %v316 = vpop.f32.mrb[0].mxu0
    %v317 = vadd.f32 %v97, %v316
    %v318 = vpop.f32.mrb[0].mxu0
    %v319 = vadd.f32 %v101, %v318
    %320 = vmatprep.mubr.f32.mxu0 0.0
    %321 = vmatmul.mubr.f32.gmra.mrb[0].mxu0 %v114
    %v322 = vpop.f32.mrb[0].mxu0
    %v323 = vadd.f32 %v97, %v322
    %v324 = vpop.f32.mrb[0].mxu0
    %v325 = vadd.f32 %v101, %v324
    %326 = vmatprep.mubr.f32.mxu0 0.0
    %327 = vmatmul.mubr.f32.gmra.mrb[0].mxu0 %v117
    %v328 = vpop.f32.mrb[0].mxu0
    %v329 = vadd.f32 %v97, %v328
    %v330 = vpop.f32.mrb[0].mxu0
    %v331 = vadd.f32 %v101, %v330
    %332 = vmatprep.mubr.f32.mxu0 0.0
    %333 = vmatmul.mubr.f32.gmra.mrb[0].mxu0 %v120
    %v334 = vpop.f32.mrb[0].mxu0
    %v335 = vadd.f32 %v97, %v334
    %v336 = vpop.f32.mrb[0].mxu0
    %v337 = vadd.f32 %v101, %v336
    %338 = vmatprep.mubr.f32.mxu0 0.0
    %339 = vmatmul.mubr.f32.gmra.mrb[0].mxu0 %v123
    %v340 = vpop.f32.mrb[0].mxu0
    %v341 = vadd.f32 %v97, %v340
    %v342 = vpop.f32.mrb[0].mxu0
    %v343 = vadd.f32 %v101, %v342
    %344 = vmatprep.mubr.f32.mxu0 0.0
    %345 = vmatmul.mubr.f32.gmra.mrb[0].mxu0 %v126
    %v346 = vpop.f32.mrb[0].mxu0
    %v347 = vadd.f32 %v97, %v346
    %v348 = vpop.f32.mrb[0].mxu0
    %v349 = vadd.f32 %v101, %v348
    %350 = vmatprep.mubr.f32.mxu0 0.0
    %351 = vmatmul.mubr.f32.gmra.mrb[0].mxu0 %v129
    %v352 = vpop.f32.mrb[0].mxu0
    %v353 = vadd.f32 %v97, %v352
    %v354 = vpop.f32.mrb[0].mxu0
    %v355 = vadd.f32 %v101, %v354
    %356 = vdwg.mxu0
    %357 = vst [vmem:[#allocation2] sm:$0xff] %v198
    %358 = vst [vmem:[#allocation2 + $0x8] sm:$0xff] %v200
    %359 = vst [vmem:[#allocation2 + $0x10] sm:$0xff] %v311
    %360 = vst [vmem:[#allocation2 + $0x18] sm:$0xff] %v313
    %361 = vst [vmem:[#allocation2 + $0x20] sm:$0xff] %v204
    %362 = vst [vmem:[#allocation2 + $0x28] sm:$0xff] %v206
    %363 = vst [vmem:[#allocation2 + $0x30] sm:$0xff] %v317
    %364 = vst [vmem:[#allocation2 + $0x38] sm:$0xff] %v319
    %365 = vst [vmem:[#allocation2 + $0x40] sm:$0xff] %v210
    %366 = vst [vmem:[#allocation2 + $0x48] sm:$0xff] %v212
    %367 = vst [vmem:[#allocation2 + $0x50] sm:$0xff] %v323
    %368 = vst [vmem:[#allocation2 + $0x58] sm:$0xff] %v325
    %369 = vst [vmem:[#allocation2 + $0x60] sm:$0xff] %v216
    %370 = vst [vmem:[#allocation2 + $0x68] sm:$0xff] %v218
    %371 = vst [vmem:[#allocation2 + $0x70] sm:$0xff] %v329
    %372 = vst [vmem:[#allocation2 + $0x78] sm:$0xff] %v331
    %373 = vst [vmem:[#allocation2 + $0x80] sm:$0xff] %v222
    %374 = vst [vmem:[#allocation2 + $0x88] sm:$0xff] %v224
    %375 = vst [vmem:[#allocation2 + $0x90] sm:$0xff] %v335
    %376 = vst [vmem:[#allocation2 + $0x98] sm:$0xff] %v337
    %377 = vst [vmem:[#allocation2 + $0xa0] sm:$0xff] %v228
    %378 = vst [vmem:[#allocation2 + $0xa8] sm:$0xff] %v230
    %379 = vst [vmem:[#allocation2 + $0xb0] sm:$0xff] %v341
    %380 = vst [vmem:[#allocation2 + $0xb8] sm:$0xff] %v343
    %381 = vst [vmem:[#allocation2 + $0xc0] sm:$0xff] %v234
    %382 = vst [vmem:[#allocation2 + $0xc8] sm:$0xff] %v236
    %383 = vst [vmem:[#allocation2 + $0xd0] sm:$0xff] %v347
    %384 = vst [vmem:[#allocation2 + $0xd8] sm:$0xff] %v349
    %385 = vst [vmem:[#allocation2 + $0xe0] sm:$0xff] %v240
    %386 = vst [vmem:[#allocation2 + $0xe8] sm:$0xff] %v242
    %387 = vst [vmem:[#allocation2 + $0xf0] sm:$0xff] %v353
    %388 = vst [vmem:[#allocation2 + $0xf8] sm:$0xff] %v355
    %v389 = vld [vmem:[#allocation3] sm:$0xff]
    %v390 = vld [vmem:[#allocation4] sm:$0xff]
    %s391 = smul.u32 0, 4
    %s392 = smul.addr %s391, 8
    %s393 = scalar_lea.vmem [#allocation2], %s392
    %v394 = vld [vmem:[%s393] sm:$0xff]
    %v395 = vld [vmem:[%s393 + $0x8] sm:$0xff]
    %v396 = vld [vmem:[%s393 + $0x10] sm:$0xff]
    %v397 = vld [vmem:[%s393 + $0x18] sm:$0xff]
    %v398 = vld [vmem:[#allocation9] sm:$0xff]
    %v399 = vld [vmem:[#allocation9 + $0x8] sm:$0xff]
    %v400 = vld [vmem:[#allocation9 + $0x10] sm:$0xff]
    %v401 = vld [vmem:[#allocation9 + $0x18] sm:$0xff]
    %v402 = vld [vmem:[#allocation9 + $0x20] sm:$0xff]
    %v403 = vld [vmem:[#allocation9 + $0x28] sm:$0xff]
    %v404 = vld [vmem:[#allocation9 + $0x30] sm:$0xff]
    %v405 = vld [vmem:[#allocation9 + $0x38] sm:$0xff]
    %v406 = vld [vmem:[#allocation9 + $0x40] sm:$0xff]
    %v407 = vld [vmem:[#allocation9 + $0x48] sm:$0xff]
    %v408 = vld [vmem:[#allocation9 + $0x50] sm:$0xff]
    %v409 = vld [vmem:[#allocation9 + $0x58] sm:$0xff]
    %v410 = vld [vmem:[#allocation9 + $0x60] sm:$0xff]
    %v411 = vld [vmem:[#allocation9 + $0x68] sm:$0xff]
    %v412 = vld [vmem:[#allocation9 + $0x70] sm:$0xff]
    %v413 = vld [vmem:[#allocation9 + $0x78] sm:$0xff]
    %v414 = vld [vmem:[#allocation9 + $0x80] sm:$0xff]
    %v415 = vld [vmem:[#allocation9 + $0x88] sm:$0xff]
    %v416 = vld [vmem:[#allocation9 + $0x90] sm:$0xff]
    %v417 = vld [vmem:[#allocation9 + $0x98] sm:$0xff]
    %v418 = vld [vmem:[#allocation9 + $0xa0] sm:$0xff]
    %v419 = vld [vmem:[#allocation9 + $0xa8] sm:$0xff]
    %v420 = vld [vmem:[#allocation9 + $0xb0] sm:$0xff]
    %v421 = vld [vmem:[#allocation9 + $0xb8] sm:$0xff]
    %v422 = vld [vmem:[#allocation9 + $0xc0] sm:$0xff]
    %v423 = vld [vmem:[#allocation9 + $0xc8] sm:$0xff]
    %v424 = vld [vmem:[#allocation9 + $0xd0] sm:$0xff]
    %v425 = vld [vmem:[#allocation9 + $0xd8] sm:$0xff]
    %v426 = vld [vmem:[#allocation9 + $0xe0] sm:$0xff]
    %v427 = vld [vmem:[#allocation9 + $0xe8] sm:$0xff]
    %v428 = vld [vmem:[#allocation9 + $0xf0] sm:$0xff]
    %v429 = vld [vmem:[#allocation9 + $0xf8] sm:$0xff]
    %v430 = vld [vmem:[#allocation9 + $0x100] sm:$0xff]
    %v431 = vld [vmem:[#allocation9 + $0x108] sm:$0xff]
    %v432 = vld [vmem:[#allocation9 + $0x110] sm:$0xff]
    %v433 = vld [vmem:[#allocation9 + $0x118] sm:$0xff]
    %v434 = vld [vmem:[#allocation9 + $0x120] sm:$0xff]
    %v435 = vld [vmem:[#allocation9 + $0x128] sm:$0xff]
    %v436 = vld [vmem:[#allocation9 + $0x130] sm:$0xff]
    %v437 = vld [vmem:[#allocation9 + $0x138] sm:$0xff]
    %v438 = vld [vmem:[#allocation9 + $0x140] sm:$0xff]
    %v439 = vld [vmem:[#allocation9 + $0x148] sm:$0xff]
    %v440 = vld [vmem:[#allocation9 + $0x150] sm:$0xff]
    %v441 = vld [vmem:[#allocation9 + $0x158] sm:$0xff]
    %v442 = vld [vmem:[#allocation9 + $0x160] sm:$0xff]
    %v443 = vld [vmem:[#allocation9 + $0x168] sm:$0xff]
    %v444 = vld [vmem:[#allocation9 + $0x170] sm:$0xff]
    %v445 = vld [vmem:[#allocation9 + $0x178] sm:$0xff]
    %v446 = vld [vmem:[#allocation9 + $0x180] sm:$0xff]
    %v447 = vld [vmem:[#allocation9 + $0x188] sm:$0xff]
    %v448 = vld [vmem:[#allocation9 + $0x190] sm:$0xff]
    %v449 = vld [vmem:[#allocation9 + $0x198] sm:$0xff]
    %v450 = vld [vmem:[#allocation9 + $0x1a0] sm:$0xff]
    %v451 = vld [vmem:[#allocation9 + $0x1a8] sm:$0xff]
    %v452 = vld [vmem:[#allocation9 + $0x1b0] sm:$0xff]
    %v453 = vld [vmem:[#allocation9 + $0x1b8] sm:$0xff]
    %v454 = vld [vmem:[#allocation9 + $0x1c0] sm:$0xff]
    %v455 = vld [vmem:[#allocation9 + $0x1c8] sm:$0xff]
    %v456 = vld [vmem:[#allocation9 + $0x1d0] sm:$0xff]
    %v457 = vld [vmem:[#allocation9 + $0x1d8] sm:$0xff]
    %v458 = vld [vmem:[#allocation9 + $0x1e0] sm:$0xff]
    %v459 = vld [vmem:[#allocation9 + $0x1e8] sm:$0xff]
    %v460 = vld [vmem:[#allocation9 + $0x1f0] sm:$0xff]
    %v461 = vld [vmem:[#allocation9 + $0x1f8] sm:$0xff]
    %462 = vmatprep.subr.mxu0 %v399
    %463 = vmatpush1.msra.mxu0 %v398
    %464 = vmatprep.subr.mxu0 %v403
    %465 = vmatpush1.msra.mxu0 %v402
    %466 = vmatprep.subr.mxu0 %v407
    %467 = vmatpush1.msra.mxu0 %v406
    %468 = vmatprep.subr.mxu0 %v411
    %469 = vmatpush1.msra.mxu0 %v410
    %470 = vmatprep.subr.mxu0 %v415
    %471 = vmatpush1.msra.mxu0 %v414
    %472 = vmatprep.subr.mxu0 %v419
    %473 = vmatpush1.msra.mxu0 %v418
    %474 = vmatprep.subr.mxu0 %v423
    %475 = vmatpush1.msra.mxu0 %v422
    %476 = vmatprep.subr.mxu0 %v427
    %477 = vmatpush1.msra.mxu0 %v426
    %478 = vmatprep.subr.mxu0 %v431
    %479 = vmatpush1.msra.mxu0 %v430
    %480 = vmatprep.subr.mxu0 %v435
    %481 = vmatpush1.msra.mxu0 %v434
    %482 = vmatprep.subr.mxu0 %v439
    %483 = vmatpush1.msra.mxu0 %v438
    %484 = vmatprep.subr.mxu0 %v443
    %485 = vmatpush1.msra.mxu0 %v442
    %486 = vmatprep.subr.mxu0 %v447
    %487 = vmatpush1.msra.mxu0 %v446
    %488 = vmatprep.subr.mxu0 %v451
    %489 = vmatpush1.msra.mxu0 %v450
    %490 = vmatprep.subr.mxu0 %v455
    %491 = vmatpush1.msra.mxu0 %v454
    %492 = vmatprep.subr.mxu0 %v459
    %493 = vmatpush1.msra.mxu0 %v458
    %494 = vmatprep.subr.mxu0 0.0
    %495 = vmatpush1.msra.mxu0 0.0
    %496 = vmatprep.subr.mxu0 0.0
    %497 = vmatpush1.msra.mxu0 0.0
    %498 = vmatprep.subr.mxu0 0.0
    %499 = vmatpush1.msra.mxu0 0.0
    %500 = vmatprep.subr.mxu0 0.0
    %501 = vmatpush1.msra.mxu0 0.0
    %502 = vmatprep.subr.mxu0 0.0
    %503 = vmatpush1.msra.mxu0 0.0
    %504 = vmatprep.subr.mxu0 0.0
    %505 = vmatpush1.msra.mxu0 0.0
    %506 = vmatprep.subr.mxu0 0.0
    %507 = vmatpush1.msra.mxu0 0.0
    %508 = vmatprep.subr.mxu0 0.0
    %509 = vmatpush1.msra.mxu0 0.0
    %510 = vmatprep.subr.mxu0 0.0
    %511 = vmatpush1.msra.mxu0 0.0
    %512 = vmatprep.subr.mxu0 0.0
    %513 = vmatpush1.msra.mxu0 0.0
    %514 = vmatprep.subr.mxu0 0.0
    %515 = vmatpush1.msra.mxu0 0.0
    %516 = vmatprep.subr.mxu0 0.0
    %517 = vmatpush1.msra.mxu0 0.0
    %518 = vmatprep.subr.mxu0 0.0
    %519 = vmatpush1.msra.mxu0 0.0
    %520 = vmatprep.subr.mxu0 0.0
    %521 = vmatpush1.msra.mxu0 0.0
    %522 = vmatprep.subr.mxu0 0.0
    %523 = vmatpush1.msra.mxu0 0.0
    %524 = vmatprep.subr.mxu0 0.0
    %525 = vmatpush1.msra.mxu0 0.0
    %526 = vmatprep.mubr.f32.mxu0 0.0
    %527 = vmatmul.mubr.f32.gmra.mrb[0].mxu0 %v389
    %v528 = vpop.f32.mrb[0].mxu0
    %v529 = vadd.f32 0.0, %v528
    %v530 = vpop.f32.mrb[0].mxu0
    %v531 = vadd.f32 0.0, %v530
    %532 = vdwg.mxu0
    %533 = vmatprep.subr.mxu0 %v401
    %534 = vmatpush1.msra.mxu0 %v400
    %535 = vmatprep.subr.mxu0 %v405
    %536 = vmatpush1.msra.mxu0 %v404
    %537 = vmatprep.subr.mxu0 %v409
    %538 = vmatpush1.msra.mxu0 %v408
    %539 = vmatprep.subr.mxu0 %v413
    %540 = vmatpush1.msra.mxu0 %v412
    %541 = vmatprep.subr.mxu0 %v417
    %542 = vmatpush1.msra.mxu0 %v416
    %543 = vmatprep.subr.mxu0 %v421
    %544 = vmatpush1.msra.mxu0 %v420
    %545 = vmatprep.subr.mxu0 %v425
    %546 = vmatpush1.msra.mxu0 %v424
    %547 = vmatprep.subr.mxu0 %v429
    %548 = vmatpush1.msra.mxu0 %v428
    %549 = vmatprep.subr.mxu0 %v433
    %550 = vmatpush1.msra.mxu0 %v432
    %551 = vmatprep.subr.mxu0 %v437
    %552 = vmatpush1.msra.mxu0 %v436
    %553 = vmatprep.subr.mxu0 %v441
    %554 = vmatpush1.msra.mxu0 %v440
    %555 = vmatprep.subr.mxu0 %v445
    %556 = vmatpush1.msra.mxu0 %v444
    %557 = vmatprep.subr.mxu0 %v449
    %558 = vmatpush1.msra.mxu0 %v448
    %559 = vmatprep.subr.mxu0 %v453
    %560 = vmatpush1.msra.mxu0 %v452
    %561 = vmatprep.subr.mxu0 %v457
    %562 = vmatpush1.msra.mxu0 %v456
    %563 = vmatprep.subr.mxu0 %v461
    %564 = vmatpush1.msra.mxu0 %v460
    %565 = vmatprep.subr.mxu0 0.0
    %566 = vmatpush1.msra.mxu0 0.0
    %567 = vmatprep.subr.mxu0 0.0
    %568 = vmatpush1.msra.mxu0 0.0
    %569 = vmatprep.subr.mxu0 0.0
    %570 = vmatpush1.msra.mxu0 0.0
    %571 = vmatprep.subr.mxu0 0.0
    %572 = vmatpush1.msra.mxu0 0.0
    %573 = vmatprep.subr.mxu0 0.0
    %574 = vmatpush1.msra.mxu0 0.0
    %575 = vmatprep.subr.mxu0 0.0
    %576 = vmatpush1.msra.mxu0 0.0
    %577 = vmatprep.subr.mxu0 0.0
    %578 = vmatpush1.msra.mxu0 0.0
    %579 = vmatprep.subr.mxu0 0.0
    %580 = vmatpush1.msra.mxu0 0.0
    %581 = vmatprep.subr.mxu0 0.0
    %582 = vmatpush1.msra.mxu0 0.0
    %583 = vmatprep.subr.mxu0 0.0
    %584 = vmatpush1.msra.mxu0 0.0
    %585 = vmatprep.subr.mxu0 0.0
    %586 = vmatpush1.msra.mxu0 0.0
    %587 = vmatprep.subr.mxu0 0.0
    %588 = vmatpush1.msra.mxu0 0.0
    %589 = vmatprep.subr.mxu0 0.0
    %590 = vmatpush1.msra.mxu0 0.0
    %591 = vmatprep.subr.mxu0 0.0
    %592 = vmatpush1.msra.mxu0 0.0
    %593 = vmatprep.subr.mxu0 0.0
    %594 = vmatpush1.msra.mxu0 0.0
    %595 = vmatprep.subr.mxu0 0.0
    %596 = vmatpush1.msra.mxu0 0.0
    %597 = vmatprep.mubr.f32.mxu0 0.0
    %598 = vmatmul.mubr.f32.gmra.mrb[0].mxu0 %v389
    %v599 = vpop.f32.mrb[0].mxu0
    %v600 = vadd.f32 0.0, %v599
    %v601 = vpop.f32.mrb[0].mxu0
    %v602 = vadd.f32 0.0, %v601
    %603 = vdwg.mxu0
    %v604 = vadd.f32 %v394, %v529
    %v605 = vadd.f32 %v395, %v531
    %v606 = vadd.f32 %v396, %v600
    %v607 = vadd.f32 %v397, %v602
    %v608 = vmul.f32 %v604, 0.5
    %v609 = vtanh.pop %v608
    %v610 = vmul.f32 %v609, 0.5
    %v611 = vadd.f32 %v610, 0.5
    %v612 = vmul.f32 %v605, 0.5
    %v613 = vtanh.pop %v612
    %v614 = vmul.f32 %v613, 0.5
    %v615 = vadd.f32 %v614, 0.5
    %v616 = vtanh.pop %v606
    %v617 = vmul.f32 %v607, 0.5
    %v618 = vtanh.pop %v617
    %v619 = vmul.f32 %v618, 0.5
    %v620 = vadd.f32 %v619, 0.5
    %v621 = vmul.f32 %v615, %v390
    %v622 = vmul.f32 %v611, %v616
    %v623 = vadd.f32 %v621, %v622
    %v624 = vtanh.pop %v623
    %v625 = vmul.f32 %v620, %v624
    %s626 = smul.u32 1, 4
    %s627 = smul.addr %s626, 8
    %s628 = scalar_lea.vmem [#allocation2], %s627
    %v629 = vld [vmem:[%s628] sm:$0xff]
    %v630 = vld [vmem:[%s628 + $0x8] sm:$0xff]
    %v631 = vld [vmem:[%s628 + $0x10] sm:$0xff]
    %v632 = vld [vmem:[%s628 + $0x18] sm:$0xff]
    %633 = vmatprep.subr.mxu0 %v399
    %634 = vmatpush1.msra.mxu0 %v398
    %635 = vmatprep.subr.mxu0 %v403
    %636 = vmatpush1.msra.mxu0 %v402
    %637 = vmatprep.subr.mxu0 %v407
    %638 = vmatpush1.msra.mxu0 %v406
    %639 = vmatprep.subr.mxu0 %v411
    %640 = vmatpush1.msra.mxu0 %v410
    %641 = vmatprep.subr.mxu0 %v415
    %642 = vmatpush1.msra.mxu0 %v414
    %643 = vmatprep.subr.mxu0 %v419
    %644 = vmatpush1.msra.mxu0 %v418
    %645 = vmatprep.subr.mxu0 %v423
    %646 = vmatpush1.msra.mxu0 %v422
    %647 = vmatprep.subr.mxu0 %v427
    %648 = vmatpush1.msra.mxu0 %v426
    %649 = vmatprep.subr.mxu0 %v431
    %650 = vmatpush1.msra.mxu0 %v430
    %651 = vmatprep.subr.mxu0 %v435
    %652 = vmatpush1.msra.mxu0 %v434
    %653 = vmatprep.subr.mxu0 %v439
    %654 = vmatpush1.msra.mxu0 %v438
    %655 = vmatprep.subr.mxu0 %v443
    %656 = vmatpush1.msra.mxu0 %v442
    %657 = vmatprep.subr.mxu0 %v447
    %658 = vmatpush1.msra.mxu0 %v446
    %659 = vmatprep.subr.mxu0 %v451
    %660 = vmatpush1.msra.mxu0 %v450
    %661 = vmatprep.subr.mxu0 %v455
    %662 = vmatpush1.msra.mxu0 %v454
    %663 = vmatprep.subr.mxu0 %v459
    %664 = vmatpush1.msra.mxu0 %v458
    %665 = vmatprep.subr.mxu0 0.0
    %666 = vmatpush1.msra.mxu0 0.0
    %667 = vmatprep.subr.mxu0 0.0
    %668 = vmatpush1.msra.mxu0 0.0
    %669 = vmatprep.subr.mxu0 0.0
    %670 = vmatpush1.msra.mxu0 0.0
    %671 = vmatprep.subr.mxu0 0.0
    %672 = vmatpush1.msra.mxu0 0.0
    %673 = vmatprep.subr.mxu0 0.0
    %674 = vmatpush1.msra.mxu0 0.0
    %675 = vmatprep.subr.mxu0 0.0
    %676 = vmatpush1.msra.mxu0 0.0
    %677 = vmatprep.subr.mxu0 0.0
    %678 = vmatpush1.msra.mxu0 0.0
    %679 = vmatprep.subr.mxu0 0.0
    %680 = vmatpush1.msra.mxu0 0.0
    %681 = vmatprep.subr.mxu0 0.0
    %682 = vmatpush1.msra.mxu0 0.0
    %683 = vmatprep.subr.mxu0 0.0
    %684 = vmatpush1.msra.mxu0 0.0
    %685 = vmatprep.subr.mxu0 0.0
    %686 = vmatpush1.msra.mxu0 0.0
    %687 = vmatprep.subr.mxu0 0.0
    %688 = vmatpush1.msra.mxu0 0.0
    %689 = vmatprep.subr.mxu0 0.0
    %690 = vmatpush1.msra.mxu0 0.0
    %691 = vmatprep.subr.mxu0 0.0
    %692 = vmatpush1.msra.mxu0 0.0
    %693 = vmatprep.subr.mxu0 0.0
    %694 = vmatpush1.msra.mxu0 0.0
    %695 = vmatprep.subr.mxu0 0.0
    %696 = vmatpush1.msra.mxu0 0.0
    %697 = vmatprep.mubr.f32.mxu0 0.0
    %698 = vmatmul.mubr.f32.gmra.mrb[0].mxu0 %v625
    %v699 = vpop.f32.mrb[0].mxu0
    %v700 = vadd.f32 0.0, %v699
    %v701 = vpop.f32.mrb[0].mxu0
    %v702 = vadd.f32 0.0, %v701
    %703 = vdwg.mxu0
    %704 = vmatprep.subr.mxu0 %v401
    %705 = vmatpush1.msra.mxu0 %v400
    %706 = vmatprep.subr.mxu0 %v405
    %707 = vmatpush1.msra.mxu0 %v404
    %708 = vmatprep.subr.mxu0 %v409
    %709 = vmatpush1.msra.mxu0 %v408
    %710 = vmatprep.subr.mxu0 %v413
    %711 = vmatpush1.msra.mxu0 %v412
    %712 = vmatprep.subr.mxu0 %v417
    %713 = vmatpush1.msra.mxu0 %v416
    %714 = vmatprep.subr.mxu0 %v421
    %715 = vmatpush1.msra.mxu0 %v420
    %716 = vmatprep.subr.mxu0 %v425
    %717 = vmatpush1.msra.mxu0 %v424
    %718 = vmatprep.subr.mxu0 %v429
    %719 = vmatpush1.msra.mxu0 %v428
    %720 = vmatprep.subr.mxu0 %v433
    %721 = vmatpush1.msra.mxu0 %v432
    %722 = vmatprep.subr.mxu0 %v437
    %723 = vmatpush1.msra.mxu0 %v436
    %724 = vmatprep.subr.mxu0 %v441
    %725 = vmatpush1.msra.mxu0 %v440
    %726 = vmatprep.subr.mxu0 %v445
    %727 = vmatpush1.msra.mxu0 %v444
    %728 = vmatprep.subr.mxu0 %v449
    %729 = vmatpush1.msra.mxu0 %v448
    %730 = vmatprep.subr.mxu0 %v453
    %731 = vmatpush1.msra.mxu0 %v452
    %732 = vmatprep.subr.mxu0 %v457
    %733 = vmatpush1.msra.mxu0 %v456
    %734 = vmatprep.subr.mxu0 %v461
    %735 = vmatpush1.msra.mxu0 %v460
    %736 = vmatprep.subr.mxu0 0.0
    %737 = vmatpush1.msra.mxu0 0.0
    %738 = vmatprep.subr.mxu0 0.0
    %739 = vmatpush1.msra.mxu0 0.0
    %740 = vmatprep.subr.mxu0 0.0
    %741 = vmatpush1.msra.mxu0 0.0
    %742 = vmatprep.subr.mxu0 0.0
    %743 = vmatpush1.msra.mxu0 0.0
    %744 = vmatprep.subr.mxu0 0.0
    %745 = vmatpush1.msra.mxu0 0.0
    %746 = vmatprep.subr.mxu0 0.0
    %747 = vmatpush1.msra.mxu0 0.0
    %748 = vmatprep.subr.mxu0 0.0
    %749 = vmatpush1.msra.mxu0 0.0
    %750 = vmatprep.subr.mxu0 0.0
    %751 = vmatpush1.msra.mxu0 0.0
    %752 = vmatprep.subr.mxu0 0.0
    %753 = vmatpush1.msra.mxu0 0.0
    %754 = vmatprep.subr.mxu0 0.0
    %755 = vmatpush1.msra.mxu0 0.0
    %756 = vmatprep.subr.mxu0 0.0
    %757 = vmatpush1.msra.mxu0 0.0
    %758 = vmatprep.subr.mxu0 0.0
    %759 = vmatpush1.msra.mxu0 0.0
    %760 = vmatprep.subr.mxu0 0.0
    %761 = vmatpush1.msra.mxu0 0.0
    %762 = vmatprep.subr.mxu0 0.0
    %763 = vmatpush1.msra.mxu0 0.0
    %764 = vmatprep.subr.mxu0 0.0
    %765 = vmatpush1.msra.mxu0 0.0
    %766 = vmatprep.subr.mxu0 0.0
    %767 = vmatpush1.msra.mxu0 0.0
    %768 = vmatprep.mubr.f32.mxu0 0.0
    %769 = vmatmul.mubr.f32.gmra.mrb[0].mxu0 %v625
    %v770 = vpop.f32.mrb[0].mxu0
    %v771 = vadd.f32 0.0, %v770
    %v772 = vpop.f32.mrb[0].mxu0
    %v773 = vadd.f32 0.0, %v772
    %774 = vdwg.mxu0
    %v775 = vadd.f32 %v629, %v700
    %v776 = vadd.f32 %v630, %v702
    %v777 = vadd.f32 %v631, %v771
    %v778 = vadd.f32 %v632, %v773
    %v779 = vmul.f32 %v775, 0.5
    %v780 = vtanh.pop %v779
    %v781 = vmul.f32 %v780, 0.5
    %v782 = vadd.f32 %v781, 0.5
    %v783 = vmul.f32 %v776, 0.5
    %v784 = vtanh.pop %v783
    %v785 = vmul.f32 %v784, 0.5
    %v786 = vadd.f32 %v785, 0.5
    %v787 = vtanh.pop %v777
    %v788 = vmul.f32 %v778, 0.5
    %v789 = vtanh.pop %v788
    %v790 = vmul.f32 %v789, 0.5
    %v791 = vadd.f32 %v790, 0.5
    %v792 = vmul.f32 %v786, %v623
    %v793 = vmul.f32 %v782, %v787
    %v794 = vadd.f32 %v792, %v793
    %v795 = vtanh.pop %v794
    %v796 = vmul.f32 %v791, %v795
    %s797 = smul.u32 2, 4
    %s798 = smul.addr %s797, 8
    %s799 = scalar_lea.vmem [#allocation2], %s798
    %v800 = vld [vmem:[%s799] sm:$0xff]
    %v801 = vld [vmem:[%s799 + $0x8] sm:$0xff]
    %v802 = vld [vmem:[%s799 + $0x10] sm:$0xff]
    %v803 = vld [vmem:[%s799 + $0x18] sm:$0xff]
    %804 = vmatprep.subr.mxu0 %v399
    %805 = vmatpush1.msra.mxu0 %v398
    %806 = vmatprep.subr.mxu0 %v403
    %807 = vmatpush1.msra.mxu0 %v402
    %808 = vmatprep.subr.mxu0 %v407
    %809 = vmatpush1.msra.mxu0 %v406
    %810 = vmatprep.subr.mxu0 %v411
    %811 = vmatpush1.msra.mxu0 %v410
    %812 = vmatprep.subr.mxu0 %v415
    %813 = vmatpush1.msra.mxu0 %v414
    %814 = vmatprep.subr.mxu0 %v419
    %815 = vmatpush1.msra.mxu0 %v418
    %816 = vmatprep.subr.mxu0 %v423
    %817 = vmatpush1.msra.mxu0 %v422
    %818 = vmatprep.subr.mxu0 %v427
    %819 = vmatpush1.msra.mxu0 %v426
    %820 = vmatprep.subr.mxu0 %v431
    %821 = vmatpush1.msra.mxu0 %v430
    %822 = vmatprep.subr.mxu0 %v435
    %823 = vmatpush1.msra.mxu0 %v434
    %824 = vmatprep.subr.mxu0 %v439
    %825 = vmatpush1.msra.mxu0 %v438
    %826 = vmatprep.subr.mxu0 %v443
    %827 = vmatpush1.msra.mxu0 %v442
    %828 = vmatprep.subr.mxu0 %v447
    %829 = vmatpush1.msra.mxu0 %v446
    %830 = vmatprep.subr.mxu0 %v451
    %831 = vmatpush1.msra.mxu0 %v450
    %832 = vmatprep.subr.mxu0 %v455
    %833 = vmatpush1.msra.mxu0 %v454
    %834 = vmatprep.subr.mxu0 %v459
    %835 = vmatpush1.msra.mxu0 %v458
    %836 = vmatprep.subr.mxu0 0.0
    %837 = vmatpush1.msra.mxu0 0.0
    %838 = vmatprep.subr.mxu0 0.0
    %839 = vmatpush1.msra.mxu0 0.0
    %840 = vmatprep.subr.mxu0 0.0
    %841 = vmatpush1.msra.mxu0 0.0
    %842 = vmatprep.subr.mxu0 0.0
    %843 = vmatpush1.msra.mxu0 0.0
    %844 = vmatprep.subr.mxu0 0.0
    %845 = vmatpush1.msra.mxu0 0.0
    %846 = vmatprep.subr.mxu0 0.0
    %847 = vmatpush1.msra.mxu0 0.0
    %848 = vmatprep.subr.mxu0 0.0
    %849 = vmatpush1.msra.mxu0 0.0
    %850 = vmatprep.subr.mxu0 0.0
    %851 = vmatpush1.msra.mxu0 0.0
    %852 = vmatprep.subr.mxu0 0.0
    %853 = vmatpush1.msra.mxu0 0.0
    %854 = vmatprep.subr.mxu0 0.0
    %855 = vmatpush1.msra.mxu0 0.0
    %856 = vmatprep.subr.mxu0 0.0
    %857 = vmatpush1.msra.mxu0 0.0
    %858 = vmatprep.subr.mxu0 0.0
    %859 = vmatpush1.msra.mxu0 0.0
    %860 = vmatprep.subr.mxu0 0.0
    %861 = vmatpush1.msra.mxu0 0.0
    %862 = vmatprep.subr.mxu0 0.0
    %863 = vmatpush1.msra.mxu0 0.0
    %864 = vmatprep.subr.mxu0 0.0
    %865 = vmatpush1.msra.mxu0 0.0
    %866 = vmatprep.subr.mxu0 0.0
    %867 = vmatpush1.msra.mxu0 0.0
    %868 = vmatprep.mubr.f32.mxu0 0.0
    %869 = vmatmul.mubr.f32.gmra.mrb[0].mxu0 %v796
    %v870 = vpop.f32.mrb[0].mxu0
    %v871 = vadd.f32 0.0, %v870
    %v872 = vpop.f32.mrb[0].mxu0
    %v873 = vadd.f32 0.0, %v872
    %874 = vdwg.mxu0
    %875 = vmatprep.subr.mxu0 %v401
    %876 = vmatpush1.msra.mxu0 %v400
    %877 = vmatprep.subr.mxu0 %v405
    %878 = vmatpush1.msra.mxu0 %v404
    %879 = vmatprep.subr.mxu0 %v409
    %880 = vmatpush1.msra.mxu0 %v408
    %881 = vmatprep.subr.mxu0 %v413
    %882 = vmatpush1.msra.mxu0 %v412
    %883 = vmatprep.subr.mxu0 %v417
    %884 = vmatpush1.msra.mxu0 %v416
    %885 = vmatprep.subr.mxu0 %v421
    %886 = vmatpush1.msra.mxu0 %v420
    %887 = vmatprep.subr.mxu0 %v425
    %888 = vmatpush1.msra.mxu0 %v424
    %889 = vmatprep.subr.mxu0 %v429
    %890 = vmatpush1.msra.mxu0 %v428
    %891 = vmatprep.subr.mxu0 %v433
    %892 = vmatpush1.msra.mxu0 %v432
    %893 = vmatprep.subr.mxu0 %v437
    %894 = vmatpush1.msra.mxu0 %v436
    %895 = vmatprep.subr.mxu0 %v441
    %896 = vmatpush1.msra.mxu0 %v440
    %897 = vmatprep.subr.mxu0 %v445
    %898 = vmatpush1.msra.mxu0 %v444
    %899 = vmatprep.subr.mxu0 %v449
    %900 = vmatpush1.msra.mxu0 %v448
    %901 = vmatprep.subr.mxu0 %v453
    %902 = vmatpush1.msra.mxu0 %v452
    %903 = vmatprep.subr.mxu0 %v457
    %904 = vmatpush1.msra.mxu0 %v456
    %905 = vmatprep.subr.mxu0 %v461
    %906 = vmatpush1.msra.mxu0 %v460
    %907 = vmatprep.subr.mxu0 0.0
    %908 = vmatpush1.msra.mxu0 0.0
    %909 = vmatprep.subr.mxu0 0.0
    %910 = vmatpush1.msra.mxu0 0.0
    %911 = vmatprep.subr.mxu0 0.0
    %912 = vmatpush1.msra.mxu0 0.0
    %913 = vmatprep.subr.mxu0 0.0
    %914 = vmatpush1.msra.mxu0 0.0
    %915 = vmatprep.subr.mxu0 0.0
    %916 = vmatpush1.msra.mxu0 0.0
    %917 = vmatprep.subr.mxu0 0.0
    %918 = vmatpush1.msra.mxu0 0.0
    %919 = vmatprep.subr.mxu0 0.0
    %920 = vmatpush1.msra.mxu0 0.0
    %921 = vmatprep.subr.mxu0 0.0
    %922 = vmatpush1.msra.mxu0 0.0
    %923 = vmatprep.subr.mxu0 0.0
    %924 = vmatpush1.msra.mxu0 0.0
    %925 = vmatprep.subr.mxu0 0.0
    %926 = vmatpush1.msra.mxu0 0.0
    %927 = vmatprep.subr.mxu0 0.0
    %928 = vmatpush1.msra.mxu0 0.0
    %929 = vmatprep.subr.mxu0 0.0
    %930 = vmatpush1.msra.mxu0 0.0
    %931 = vmatprep.subr.mxu0 0.0
    %932 = vmatpush1.msra.mxu0 0.0
    %933 = vmatprep.subr.mxu0 0.0
    %934 = vmatpush1.msra.mxu0 0.0
    %935 = vmatprep.subr.mxu0 0.0
    %936 = vmatpush1.msra.mxu0 0.0
    %937 = vmatprep.subr.mxu0 0.0
    %938 = vmatpush1.msra.mxu0 0.0
    %939 = vmatprep.mubr.f32.mxu0 0.0
    %940 = vmatmul.mubr.f32.gmra.mrb[0].mxu0 %v796
    %v941 = vpop.f32.mrb[0].mxu0
    %v942 = vadd.f32 0.0, %v941
    %v943 = vpop.f32.mrb[0].mxu0
    %v944 = vadd.f32 0.0, %v943
    %945 = vdwg.mxu0
    %v946 = vadd.f32 %v800, %v871
    %v947 = vadd.f32 %v801, %v873
    %v948 = vadd.f32 %v802, %v942
    %v949 = vadd.f32 %v803, %v944
    %v950 = vmul.f32 %v946, 0.5
    %v951 = vtanh.pop %v950
    %v952 = vmul.f32 %v951, 0.5
    %v953 = vadd.f32 %v952, 0.5
    %v954 = vmul.f32 %v947, 0.5
    %v955 = vtanh.pop %v954
    %v956 = vmul.f32 %v955, 0.5
    %v957 = vadd.f32 %v956, 0.5
    %v958 = vtanh.pop %v948
    %v959 = vmul.f32 %v949, 0.5
    %v960 = vtanh.pop %v959
    %v961 = vmul.f32 %v960, 0.5
    %v962 = vadd.f32 %v961, 0.5
    %v963 = vmul.f32 %v957, %v794
    %v964 = vmul.f32 %v953, %v958
    %v965 = vadd.f32 %v963, %v964
    %v966 = vtanh.pop %v965
    %v967 = vmul.f32 %v962, %v966
    %s968 = smul.u32 3, 4
    %s969 = smul.addr %s968, 8
    %s970 = scalar_lea.vmem [#allocation2], %s969
    %v971 = vld [vmem:[%s970] sm:$0xff]
    %v972 = vld [vmem:[%s970 + $0x8] sm:$0xff]
    %v973 = vld [vmem:[%s970 + $0x10] sm:$0xff]
    %v974 = vld [vmem:[%s970 + $0x18] sm:$0xff]
    %975 = vmatprep.subr.mxu0 %v399
    %976 = vmatpush1.msra.mxu0 %v398
    %977 = vmatprep.subr.mxu0 %v403
    %978 = vmatpush1.msra.mxu0 %v402
    %979 = vmatprep.subr.mxu0 %v407
    %980 = vmatpush1.msra.mxu0 %v406
    %981 = vmatprep.subr.mxu0 %v411
    %982 = vmatpush1.msra.mxu0 %v410
    %983 = vmatprep.subr.mxu0 %v415
    %984 = vmatpush1.msra.mxu0 %v414
    %985 = vmatprep.subr.mxu0 %v419
    %986 = vmatpush1.msra.mxu0 %v418
    %987 = vmatprep.subr.mxu0 %v423
    %988 = vmatpush1.msra.mxu0 %v422
    %989 = vmatprep.subr.mxu0 %v427
    %990 = vmatpush1.msra.mxu0 %v426
    %991 = vmatprep.subr.mxu0 %v431
    %992 = vmatpush1.msra.mxu0 %v430
    %993 = vmatprep.subr.mxu0 %v435
    %994 = vmatpush1.msra.mxu0 %v434
    %995 = vmatprep.subr.mxu0 %v439
    %996 = vmatpush1.msra.mxu0 %v438
    %997 = vmatprep.subr.mxu0 %v443
    %998 = vmatpush1.msra.mxu0 %v442
    %999 = vmatprep.subr.mxu0 %v447
    %1000 = vmatpush1.msra.mxu0 %v446
    %1001 = vmatprep.subr.mxu0 %v451
    %1002 = vmatpush1.msra.mxu0 %v450
    %1003 = vmatprep.subr.mxu0 %v455
    %1004 = vmatpush1.msra.mxu0 %v454
    %1005 = vmatprep.subr.mxu0 %v459
    %1006 = vmatpush1.msra.mxu0 %v458
    %1007 = vmatprep.subr.mxu0 0.0
    %1008 = vmatpush1.msra.mxu0 0.0
    %1009 = vmatprep.subr.mxu0 0.0
    %1010 = vmatpush1.msra.mxu0 0.0
    %1011 = vmatprep.subr.mxu0 0.0
    %1012 = vmatpush1.msra.mxu0 0.0
    %1013 = vmatprep.subr.mxu0 0.0
    %1014 = vmatpush1.msra.mxu0 0.0
    %1015 = vmatprep.subr.mxu0 0.0
    %1016 = vmatpush1.msra.mxu0 0.0
    %1017 = vmatprep.subr.mxu0 0.0
    %1018 = vmatpush1.msra.mxu0 0.0
    %1019 = vmatprep.subr.mxu0 0.0
    %1020 = vmatpush1.msra.mxu0 0.0
    %1021 = vmatprep.subr.mxu0 0.0
    %1022 = vmatpush1.msra.mxu0 0.0
    %1023 = vmatprep.subr.mxu0 0.0
    %1024 = vmatpush1.msra.mxu0 0.0
    %1025 = vmatprep.subr.mxu0 0.0
    %1026 = vmatpush1.msra.mxu0 0.0
    %1027 = vmatprep.subr.mxu0 0.0
    %1028 = vmatpush1.msra.mxu0 0.0
    %1029 = vmatprep.subr.mxu0 0.0
    %1030 = vmatpush1.msra.mxu0 0.0
    %1031 = vmatprep.subr.mxu0 0.0
    %1032 = vmatpush1.msra.mxu0 0.0
    %1033 = vmatprep.subr.mxu0 0.0
    %1034 = vmatpush1.msra.mxu0 0.0
    %1035 = vmatprep.subr.mxu0 0.0
    %1036 = vmatpush1.msra.mxu0 0.0
    %1037 = vmatprep.subr.mxu0 0.0
    %1038 = vmatpush1.msra.mxu0 0.0
    %1039 = vmatprep.mubr.f32.mxu0 0.0
    %1040 = vmatmul.mubr.f32.gmra.mrb[0].mxu0 %v967
    %v1041 = vpop.f32.mrb[0].mxu0
    %v1042 = vadd.f32 0.0, %v1041
    %v1043 = vpop.f32.mrb[0].mxu0
    %v1044 = vadd.f32 0.0, %v1043
    %1045 = vdwg.mxu0
    %1046 = vmatprep.subr.mxu0 %v401
    %1047 = vmatpush1.msra.mxu0 %v400
    %1048 = vmatprep.subr.mxu0 %v405
    %1049 = vmatpush1.msra.mxu0 %v404
    %1050 = vmatprep.subr.mxu0 %v409
    %1051 = vmatpush1.msra.mxu0 %v408
    %1052 = vmatprep.subr.mxu0 %v413
    %1053 = vmatpush1.msra.mxu0 %v412
    %1054 = vmatprep.subr.mxu0 %v417
    %1055 = vmatpush1.msra.mxu0 %v416
    %1056 = vmatprep.subr.mxu0 %v421
    %1057 = vmatpush1.msra.mxu0 %v420
    %1058 = vmatprep.subr.mxu0 %v425
    %1059 = vmatpush1.msra.mxu0 %v424
    %1060 = vmatprep.subr.mxu0 %v429
    %1061 = vmatpush1.msra.mxu0 %v428
    %1062 = vmatprep.subr.mxu0 %v433
    %1063 = vmatpush1.msra.mxu0 %v432
    %1064 = vmatprep.subr.mxu0 %v437
    %1065 = vmatpush1.msra.mxu0 %v436
    %1066 = vmatprep.subr.mxu0 %v441
    %1067 = vmatpush1.msra.mxu0 %v440
    %1068 = vmatprep.subr.mxu0 %v445
    %1069 = vmatpush1.msra.mxu0 %v444
    %1070 = vmatprep.subr.mxu0 %v449
    %1071 = vmatpush1.msra.mxu0 %v448
    %1072 = vmatprep.subr.mxu0 %v453
    %1073 = vmatpush1.msra.mxu0 %v452
    %1074 = vmatprep.subr.mxu0 %v457
    %1075 = vmatpush1.msra.mxu0 %v456
    %1076 = vmatprep.subr.mxu0 %v461
    %1077 = vmatpush1.msra.mxu0 %v460
    %1078 = vmatprep.subr.mxu0 0.0
    %1079 = vmatpush1.msra.mxu0 0.0
    %1080 = vmatprep.subr.mxu0 0.0
    %1081 = vmatpush1.msra.mxu0 0.0
    %1082 = vmatprep.subr.mxu0 0.0
    %1083 = vmatpush1.msra.mxu0 0.0
    %1084 = vmatprep.subr.mxu0 0.0
    %1085 = vmatpush1.msra.mxu0 0.0
    %1086 = vmatprep.subr.mxu0 0.0
    %1087 = vmatpush1.msra.mxu0 0.0
    %1088 = vmatprep.subr.mxu0 0.0
    %1089 = vmatpush1.msra.mxu0 0.0
    %1090 = vmatprep.subr.mxu0 0.0
    %1091 = vmatpush1.msra.mxu0 0.0
    %1092 = vmatprep.subr.mxu0 0.0
    %1093 = vmatpush1.msra.mxu0 0.0
    %1094 = vmatprep.subr.mxu0 0.0
    %1095 = vmatpush1.msra.mxu0 0.0
    %1096 = vmatprep.subr.mxu0 0.0
    %1097 = vmatpush1.msra.mxu0 0.0
    %1098 = vmatprep.subr.mxu0 0.0
    %1099 = vmatpush1.msra.mxu0 0.0
    %1100 = vmatprep.subr.mxu0 0.0
    %1101 = vmatpush1.msra.mxu0 0.0
    %1102 = vmatprep.subr.mxu0 0.0
    %1103 = vmatpush1.msra.mxu0 0.0
    %1104 = vmatprep.subr.mxu0 0.0
    %1105 = vmatpush1.msra.mxu0 0.0
    %1106 = vmatprep.subr.mxu0 0.0
    %1107 = vmatpush1.msra.mxu0 0.0
    %1108 = vmatprep.subr.mxu0 0.0
    %1109 = vmatpush1.msra.mxu0 0.0
    %1110 = vmatprep.mubr.f32.mxu0 0.0
    %1111 = vmatmul.mubr.f32.gmra.mrb[0].mxu0 %v967
    %v1112 = vpop.f32.mrb[0].mxu0
    %v1113 = vadd.f32 0.0, %v1112
    %v1114 = vpop.f32.mrb[0].mxu0
    %v1115 = vadd.f32 0.0, %v1114
    %1116 = vdwg.mxu0
    %v1117 = vadd.f32 %v971, %v1042
    %v1118 = vadd.f32 %v972, %v1044
    %v1119 = vadd.f32 %v973, %v1113
    %v1120 = vadd.f32 %v974, %v1115
    %v1121 = vmul.f32 %v1117, 0.5
    %v1122 = vtanh.pop %v1121
    %v1123 = vmul.f32 %v1122, 0.5
    %v1124 = vadd.f32 %v1123, 0.5
    %v1125 = vmul.f32 %v1118, 0.5
    %v1126 = vtanh.pop %v1125
    %v1127 = vmul.f32 %v1126, 0.5
    %v1128 = vadd.f32 %v1127, 0.5
    %v1129 = vtanh.pop %v1119
    %v1130 = vmul.f32 %v1120, 0.5
    %v1131 = vtanh.pop %v1130
    %v1132 = vmul.f32 %v1131, 0.5
    %v1133 = vadd.f32 %v1132, 0.5
    %v1134 = vmul.f32 %v1128, %v965
    %v1135 = vmul.f32 %v1124, %v1129
    %v1136 = vadd.f32 %v1134, %v1135
    %v1137 = vtanh.pop %v1136
    %v1138 = vmul.f32 %v1133, %v1137
    %s1139 = smul.u32 4, 4
    %s1140 = smul.addr %s1139, 8
    %s1141 = scalar_lea.vmem [#allocation2], %s1140
    %v1142 = vld [vmem:[%s1141] sm:$0xff]
    %v1143 = vld [vmem:[%s1141 + $0x8] sm:$0xff]
    %v1144 = vld [vmem:[%s1141 + $0x10] sm:$0xff]
    %v1145 = vld [vmem:[%s1141 + $0x18] sm:$0xff]
    %1146 = vmatprep.subr.mxu0 %v399
    %1147 = vmatpush1.msra.mxu0 %v398
    %1148 = vmatprep.subr.mxu0 %v403
    %1149 = vmatpush1.msra.mxu0 %v402
    %1150 = vmatprep.subr.mxu0 %v407
    %1151 = vmatpush1.msra.mxu0 %v406
    %1152 = vmatprep.subr.mxu0 %v411
    %1153 = vmatpush1.msra.mxu0 %v410
    %1154 = vmatprep.subr.mxu0 %v415
    %1155 = vmatpush1.msra.mxu0 %v414
    %1156 = vmatprep.subr.mxu0 %v419
    %1157 = vmatpush1.msra.mxu0 %v418
    %1158 = vmatprep.subr.mxu0 %v423
    %1159 = vmatpush1.msra.mxu0 %v422
    %1160 = vmatprep.subr.mxu0 %v427
    %1161 = vmatpush1.msra.mxu0 %v426
    %1162 = vmatprep.subr.mxu0 %v431
    %1163 = vmatpush1.msra.mxu0 %v430
    %1164 = vmatprep.subr.mxu0 %v435
    %1165 = vmatpush1.msra.mxu0 %v434
    %1166 = vmatprep.subr.mxu0 %v439
    %1167 = vmatpush1.msra.mxu0 %v438
    %1168 = vmatprep.subr.mxu0 %v443
    %1169 = vmatpush1.msra.mxu0 %v442
    %1170 = vmatprep.subr.mxu0 %v447
    %1171 = vmatpush1.msra.mxu0 %v446
    %1172 = vmatprep.subr.mxu0 %v451
    %1173 = vmatpush1.msra.mxu0 %v450
    %1174 = vmatprep.subr.mxu0 %v455
    %1175 = vmatpush1.msra.mxu0 %v454
    %1176 = vmatprep.subr.mxu0 %v459
    %1177 = vmatpush1.msra.mxu0 %v458
    %1178 = vmatprep.subr.mxu0 0.0
    %1179 = vmatpush1.msra.mxu0 0.0
    %1180 = vmatprep.subr.mxu0 0.0
    %1181 = vmatpush1.msra.mxu0 0.0
    %1182 = vmatprep.subr.mxu0 0.0
    %1183 = vmatpush1.msra.mxu0 0.0
    %1184 = vmatprep.subr.mxu0 0.0
    %1185 = vmatpush1.msra.mxu0 0.0
    %1186 = vmatprep.subr.mxu0 0.0
    %1187 = vmatpush1.msra.mxu0 0.0
    %1188 = vmatprep.subr.mxu0 0.0
    %1189 = vmatpush1.msra.mxu0 0.0
    %1190 = vmatprep.subr.mxu0 0.0
    %1191 = vmatpush1.msra.mxu0 0.0
    %1192 = vmatprep.subr.mxu0 0.0
    %1193 = vmatpush1.msra.mxu0 0.0
    %1194 = vmatprep.subr.mxu0 0.0
    %1195 = vmatpush1.msra.mxu0 0.0
    %1196 = vmatprep.subr.mxu0 0.0
    %1197 = vmatpush1.msra.mxu0 0.0
    %1198 = vmatprep.subr.mxu0 0.0
    %1199 = vmatpush1.msra.mxu0 0.0
    %1200 = vmatprep.subr.mxu0 0.0
    %1201 = vmatpush1.msra.mxu0 0.0
    %1202 = vmatprep.subr.mxu0 0.0
    %1203 = vmatpush1.msra.mxu0 0.0
    %1204 = vmatprep.subr.mxu0 0.0
    %1205 = vmatpush1.msra.mxu0 0.0
    %1206 = vmatprep.subr.mxu0 0.0
    %1207 = vmatpush1.msra.mxu0 0.0
    %1208 = vmatprep.subr.mxu0 0.0
    %1209 = vmatpush1.msra.mxu0 0.0
    %1210 = vmatprep.mubr.f32.mxu0 0.0
    %1211 = vmatmul.mubr.f32.gmra.mrb[0].mxu0 %v1138
    %v1212 = vpop.f32.mrb[0].mxu0
    %v1213 = vadd.f32 0.0, %v1212
    %v1214 = vpop.f32.mrb[0].mxu0
    %v1215 = vadd.f32 0.0, %v1214
    %1216 = vdwg.mxu0
    %1217 = vmatprep.subr.mxu0 %v401
    %1218 = vmatpush1.msra.mxu0 %v400
    %1219 = vmatprep.subr.mxu0 %v405
    %1220 = vmatpush1.msra.mxu0 %v404
    %1221 = vmatprep.subr.mxu0 %v409
    %1222 = vmatpush1.msra.mxu0 %v408
    %1223 = vmatprep.subr.mxu0 %v413
    %1224 = vmatpush1.msra.mxu0 %v412
    %1225 = vmatprep.subr.mxu0 %v417
    %1226 = vmatpush1.msra.mxu0 %v416
    %1227 = vmatprep.subr.mxu0 %v421
    %1228 = vmatpush1.msra.mxu0 %v420
    %1229 = vmatprep.subr.mxu0 %v425
    %1230 = vmatpush1.msra.mxu0 %v424
    %1231 = vmatprep.subr.mxu0 %v429
    %1232 = vmatpush1.msra.mxu0 %v428
    %1233 = vmatprep.subr.mxu0 %v433
    %1234 = vmatpush1.msra.mxu0 %v432
    %1235 = vmatprep.subr.mxu0 %v437
    %1236 = vmatpush1.msra.mxu0 %v436
    %1237 = vmatprep.subr.mxu0 %v441
    %1238 = vmatpush1.msra.mxu0 %v440
    %1239 = vmatprep.subr.mxu0 %v445
    %1240 = vmatpush1.msra.mxu0 %v444
    %1241 = vmatprep.subr.mxu0 %v449
    %1242 = vmatpush1.msra.mxu0 %v448
    %1243 = vmatprep.subr.mxu0 %v453
    %1244 = vmatpush1.msra.mxu0 %v452
    %1245 = vmatprep.subr.mxu0 %v457
    %1246 = vmatpush1.msra.mxu0 %v456
    %1247 = vmatprep.subr.mxu0 %v461
    %1248 = vmatpush1.msra.mxu0 %v460
    %1249 = vmatprep.subr.mxu0 0.0
    %1250 = vmatpush1.msra.mxu0 0.0
    %1251 = vmatprep.subr.mxu0 0.0
    %1252 = vmatpush1.msra.mxu0 0.0
    %1253 = vmatprep.subr.mxu0 0.0
    %1254 = vmatpush1.msra.mxu0 0.0
    %1255 = vmatprep.subr.mxu0 0.0
    %1256 = vmatpush1.msra.mxu0 0.0
    %1257 = vmatprep.subr.mxu0 0.0
    %1258 = vmatpush1.msra.mxu0 0.0
    %1259 = vmatprep.subr.mxu0 0.0
    %1260 = vmatpush1.msra.mxu0 0.0
    %1261 = vmatprep.subr.mxu0 0.0
    %1262 = vmatpush1.msra.mxu0 0.0
    %1263 = vmatprep.subr.mxu0 0.0
    %1264 = vmatpush1.msra.mxu0 0.0
    %1265 = vmatprep.subr.mxu0 0.0
    %1266 = vmatpush1.msra.mxu0 0.0
    %1267 = vmatprep.subr.mxu0 0.0
    %1268 = vmatpush1.msra.mxu0 0.0
    %1269 = vmatprep.subr.mxu0 0.0
    %1270 = vmatpush1.msra.mxu0 0.0
    %1271 = vmatprep.subr.mxu0 0.0
    %1272 = vmatpush1.msra.mxu0 0.0
    %1273 = vmatprep.subr.mxu0 0.0
    %1274 = vmatpush1.msra.mxu0 0.0
    %1275 = vmatprep.subr.mxu0 0.0
    %1276 = vmatpush1.msra.mxu0 0.0
    %1277 = vmatprep.subr.mxu0 0.0
    %1278 = vmatpush1.msra.mxu0 0.0
    %1279 = vmatprep.subr.mxu0 0.0
    %1280 = vmatpush1.msra.mxu0 0.0
    %1281 = vmatprep.mubr.f32.mxu0 0.0
    %1282 = vmatmul.mubr.f32.gmra.mrb[0].mxu0 %v1138
    %v1283 = vpop.f32.mrb[0].mxu0
    %v1284 = vadd.f32 0.0, %v1283
    %v1285 = vpop.f32.mrb[0].mxu0
    %v1286 = vadd.f32 0.0, %v1285
    %1287 = vdwg.mxu0
    %v1288 = vadd.f32 %v1142, %v1213
    %v1289 = vadd.f32 %v1143, %v1215
    %v1290 = vadd.f32 %v1144, %v1284
    %v1291 = vadd.f32 %v1145, %v1286
    %v1292 = vmul.f32 %v1288, 0.5
    %v1293 = vtanh.pop %v1292
    %v1294 = vmul.f32 %v1293, 0.5
    %v1295 = vadd.f32 %v1294, 0.5
    %v1296 = vmul.f32 %v1289, 0.5
    %v1297 = vtanh.pop %v1296
    %v1298 = vmul.f32 %v1297, 0.5
    %v1299 = vadd.f32 %v1298, 0.5
    %v1300 = vtanh.pop %v1290
    %v1301 = vmul.f32 %v1291, 0.5
    %v1302 = vtanh.pop %v1301
    %v1303 = vmul.f32 %v1302, 0.5
    %v1304 = vadd.f32 %v1303, 0.5
    %v1305 = vmul.f32 %v1299, %v1136
    %v1306 = vmul.f32 %v1295, %v1300
    %v1307 = vadd.f32 %v1305, %v1306
    %v1308 = vtanh.pop %v1307
    %v1309 = vmul.f32 %v1304, %v1308
    %s1310 = smul.u32 5, 4
    %s1311 = smul.addr %s1310, 8
    %s1312 = scalar_lea.vmem [#allocation2], %s1311
    %v1313 = vld [vmem:[%s1312] sm:$0xff]
    %v1314 = vld [vmem:[%s1312 + $0x8] sm:$0xff]
    %v1315 = vld [vmem:[%s1312 + $0x10] sm:$0xff]
    %v1316 = vld [vmem:[%s1312 + $0x18] sm:$0xff]
    %1317 = vmatprep.subr.mxu0 %v399
    %1318 = vmatpush1.msra.mxu0 %v398
    %1319 = vmatprep.subr.mxu0 %v403
    %1320 = vmatpush1.msra.mxu0 %v402
    %1321 = vmatprep.subr.mxu0 %v407
    %1322 = vmatpush1.msra.mxu0 %v406
    %1323 = vmatprep.subr.mxu0 %v411
    %1324 = vmatpush1.msra.mxu0 %v410
    %1325 = vmatprep.subr.mxu0 %v415
    %1326 = vmatpush1.msra.mxu0 %v414
    %1327 = vmatprep.subr.mxu0 %v419
    %1328 = vmatpush1.msra.mxu0 %v418
    %1329 = vmatprep.subr.mxu0 %v423
    %1330 = vmatpush1.msra.mxu0 %v422
    %1331 = vmatprep.subr.mxu0 %v427
    %1332 = vmatpush1.msra.mxu0 %v426
    %1333 = vmatprep.subr.mxu0 %v431
    %1334 = vmatpush1.msra.mxu0 %v430
    %1335 = vmatprep.subr.mxu0 %v435
    %1336 = vmatpush1.msra.mxu0 %v434
    %1337 = vmatprep.subr.mxu0 %v439
    %1338 = vmatpush1.msra.mxu0 %v438
    %1339 = vmatprep.subr.mxu0 %v443
    %1340 = vmatpush1.msra.mxu0 %v442
    %1341 = vmatprep.subr.mxu0 %v447
    %1342 = vmatpush1.msra.mxu0 %v446
    %1343 = vmatprep.subr.mxu0 %v451
    %1344 = vmatpush1.msra.mxu0 %v450
    %1345 = vmatprep.subr.mxu0 %v455
    %1346 = vmatpush1.msra.mxu0 %v454
    %1347 = vmatprep.subr.mxu0 %v459
    %1348 = vmatpush1.msra.mxu0 %v458
    %1349 = vmatprep.subr.mxu0 0.0
    %1350 = vmatpush1.msra.mxu0 0.0
    %1351 = vmatprep.subr.mxu0 0.0
    %1352 = vmatpush1.msra.mxu0 0.0
    %1353 = vmatprep.subr.mxu0 0.0
    %1354 = vmatpush1.msra.mxu0 0.0
    %1355 = vmatprep.subr.mxu0 0.0
    %1356 = vmatpush1.msra.mxu0 0.0
    %1357 = vmatprep.subr.mxu0 0.0
    %1358 = vmatpush1.msra.mxu0 0.0
    %1359 = vmatprep.subr.mxu0 0.0
    %1360 = vmatpush1.msra.mxu0 0.0
    %1361 = vmatprep.subr.mxu0 0.0
    %1362 = vmatpush1.msra.mxu0 0.0
    %1363 = vmatprep.subr.mxu0 0.0
    %1364 = vmatpush1.msra.mxu0 0.0
    %1365 = vmatprep.subr.mxu0 0.0
    %1366 = vmatpush1.msra.mxu0 0.0
    %1367 = vmatprep.subr.mxu0 0.0
    %1368 = vmatpush1.msra.mxu0 0.0
    %1369 = vmatprep.subr.mxu0 0.0
    %1370 = vmatpush1.msra.mxu0 0.0
    %1371 = vmatprep.subr.mxu0 0.0
    %1372 = vmatpush1.msra.mxu0 0.0
    %1373 = vmatprep.subr.mxu0 0.0
    %1374 = vmatpush1.msra.mxu0 0.0
    %1375 = vmatprep.subr.mxu0 0.0
    %1376 = vmatpush1.msra.mxu0 0.0
    %1377 = vmatprep.subr.mxu0 0.0
    %1378 = vmatpush1.msra.mxu0 0.0
    %1379 = vmatprep.subr.mxu0 0.0
    %1380 = vmatpush1.msra.mxu0 0.0
    %1381 = vmatprep.mubr.f32.mxu0 0.0
    %1382 = vmatmul.mubr.f32.gmra.mrb[0].mxu0 %v1309
    %v1383 = vpop.f32.mrb[0].mxu0
    %v1384 = vadd.f32 0.0, %v1383
    %v1385 = vpop.f32.mrb[0].mxu0
    %v1386 = vadd.f32 0.0, %v1385
    %1387 = vdwg.mxu0
    %1388 = vmatprep.subr.mxu0 %v401
    %1389 = vmatpush1.msra.mxu0 %v400
    %1390 = vmatprep.subr.mxu0 %v405
    %1391 = vmatpush1.msra.mxu0 %v404
    %1392 = vmatprep.subr.mxu0 %v409
    %1393 = vmatpush1.msra.mxu0 %v408
    %1394 = vmatprep.subr.mxu0 %v413
    %1395 = vmatpush1.msra.mxu0 %v412
    %1396 = vmatprep.subr.mxu0 %v417
    %1397 = vmatpush1.msra.mxu0 %v416
    %1398 = vmatprep.subr.mxu0 %v421
    %1399 = vmatpush1.msra.mxu0 %v420
    %1400 = vmatprep.subr.mxu0 %v425
    %1401 = vmatpush1.msra.mxu0 %v424
    %1402 = vmatprep.subr.mxu0 %v429
    %1403 = vmatpush1.msra.mxu0 %v428
    %1404 = vmatprep.subr.mxu0 %v433
    %1405 = vmatpush1.msra.mxu0 %v432
    %1406 = vmatprep.subr.mxu0 %v437
    %1407 = vmatpush1.msra.mxu0 %v436
    %1408 = vmatprep.subr.mxu0 %v441
    %1409 = vmatpush1.msra.mxu0 %v440
    %1410 = vmatprep.subr.mxu0 %v445
    %1411 = vmatpush1.msra.mxu0 %v444
    %1412 = vmatprep.subr.mxu0 %v449
    %1413 = vmatpush1.msra.mxu0 %v448
    %1414 = vmatprep.subr.mxu0 %v453
    %1415 = vmatpush1.msra.mxu0 %v452
    %1416 = vmatprep.subr.mxu0 %v457
    %1417 = vmatpush1.msra.mxu0 %v456
    %1418 = vmatprep.subr.mxu0 %v461
    %1419 = vmatpush1.msra.mxu0 %v460
    %1420 = vmatprep.subr.mxu0 0.0
    %1421 = vmatpush1.msra.mxu0 0.0
    %1422 = vmatprep.subr.mxu0 0.0
    %1423 = vmatpush1.msra.mxu0 0.0
    %1424 = vmatprep.subr.mxu0 0.0
    %1425 = vmatpush1.msra.mxu0 0.0
    %1426 = vmatprep.subr.mxu0 0.0
    %1427 = vmatpush1.msra.mxu0 0.0
    %1428 = vmatprep.subr.mxu0 0.0
    %1429 = vmatpush1.msra.mxu0 0.0
    %1430 = vmatprep.subr.mxu0 0.0
    %1431 = vmatpush1.msra.mxu0 0.0
    %1432 = vmatprep.subr.mxu0 0.0
    %1433 = vmatpush1.msra.mxu0 0.0
    %1434 = vmatprep.subr.mxu0 0.0
    %1435 = vmatpush1.msra.mxu0 0.0
    %1436 = vmatprep.subr.mxu0 0.0
    %1437 = vmatpush1.msra.mxu0 0.0
    %1438 = vmatprep.subr.mxu0 0.0
    %1439 = vmatpush1.msra.mxu0 0.0
    %1440 = vmatprep.subr.mxu0 0.0
    %1441 = vmatpush1.msra.mxu0 0.0
    %1442 = vmatprep.subr.mxu0 0.0
    %1443 = vmatpush1.msra.mxu0 0.0
    %1444 = vmatprep.subr.mxu0 0.0
    %1445 = vmatpush1.msra.mxu0 0.0
    %1446 = vmatprep.subr.mxu0 0.0
    %1447 = vmatpush1.msra.mxu0 0.0
    %1448 = vmatprep.subr.mxu0 0.0
    %1449 = vmatpush1.msra.mxu0 0.0
    %1450 = vmatprep.subr.mxu0 0.0
    %1451 = vmatpush1.msra.mxu0 0.0
    %1452 = vmatprep.mubr.f32.mxu0 0.0
    %1453 = vmatmul.mubr.f32.gmra.mrb[0].mxu0 %v1309
    %v1454 = vpop.f32.mrb[0].mxu0
    %v1455 = vadd.f32 0.0, %v1454
    %v1456 = vpop.f32.mrb[0].mxu0
    %v1457 = vadd.f32 0.0, %v1456
    %1458 = vdwg.mxu0
    %v1459 = vadd.f32 %v1313, %v1384
    %v1460 = vadd.f32 %v1314, %v1386
    %v1461 = vadd.f32 %v1315, %v1455
    %v1462 = vadd.f32 %v1316, %v1457
    %v1463 = vmul.f32 %v1459, 0.5
    %v1464 = vtanh.pop %v1463
    %v1465 = vmul.f32 %v1464, 0.5
    %v1466 = vadd.f32 %v1465, 0.5
    %v1467 = vmul.f32 %v1460, 0.5
    %v1468 = vtanh.pop %v1467
    %v1469 = vmul.f32 %v1468, 0.5
    %v1470 = vadd.f32 %v1469, 0.5
    %v1471 = vtanh.pop %v1461
    %v1472 = vmul.f32 %v1462, 0.5
    %v1473 = vtanh.pop %v1472
    %v1474 = vmul.f32 %v1473, 0.5
    %v1475 = vadd.f32 %v1474, 0.5
    %v1476 = vmul.f32 %v1470, %v1307
    %v1477 = vmul.f32 %v1466, %v1471
    %v1478 = vadd.f32 %v1476, %v1477
    %v1479 = vtanh.pop %v1478
    %v1480 = vmul.f32 %v1475, %v1479
    %s1481 = smul.u32 6, 4
    %s1482 = smul.addr %s1481, 8
    %s1483 = scalar_lea.vmem [#allocation2], %s1482
    %v1484 = vld [vmem:[%s1483] sm:$0xff]
    %v1485 = vld [vmem:[%s1483 + $0x8] sm:$0xff]
    %v1486 = vld [vmem:[%s1483 + $0x10] sm:$0xff]
    %v1487 = vld [vmem:[%s1483 + $0x18] sm:$0xff]
    %1488 = vmatprep.subr.mxu0 %v399
    %1489 = vmatpush1.msra.mxu0 %v398
    %1490 = vmatprep.subr.mxu0 %v403
    %1491 = vmatpush1.msra.mxu0 %v402
    %1492 = vmatprep.subr.mxu0 %v407
    %1493 = vmatpush1.msra.mxu0 %v406
    %1494 = vmatprep.subr.mxu0 %v411
    %1495 = vmatpush1.msra.mxu0 %v410
    %1496 = vmatprep.subr.mxu0 %v415
    %1497 = vmatpush1.msra.mxu0 %v414
    %1498 = vmatprep.subr.mxu0 %v419
    %1499 = vmatpush1.msra.mxu0 %v418
    %1500 = vmatprep.subr.mxu0 %v423
    %1501 = vmatpush1.msra.mxu0 %v422
    %1502 = vmatprep.subr.mxu0 %v427
    %1503 = vmatpush1.msra.mxu0 %v426
    %1504 = vmatprep.subr.mxu0 %v431
    %1505 = vmatpush1.msra.mxu0 %v430
    %1506 = vmatprep.subr.mxu0 %v435
    %1507 = vmatpush1.msra.mxu0 %v434
    %1508 = vmatprep.subr.mxu0 %v439
    %1509 = vmatpush1.msra.mxu0 %v438
    %1510 = vmatprep.subr.mxu0 %v443
    %1511 = vmatpush1.msra.mxu0 %v442
    %1512 = vmatprep.subr.mxu0 %v447
    %1513 = vmatpush1.msra.mxu0 %v446
    %1514 = vmatprep.subr.mxu0 %v451
    %1515 = vmatpush1.msra.mxu0 %v450
    %1516 = vmatprep.subr.mxu0 %v455
    %1517 = vmatpush1.msra.mxu0 %v454
    %1518 = vmatprep.subr.mxu0 %v459
    %1519 = vmatpush1.msra.mxu0 %v458
    %1520 = vmatprep.subr.mxu0 0.0
    %1521 = vmatpush1.msra.mxu0 0.0
    %1522 = vmatprep.subr.mxu0 0.0
    %1523 = vmatpush1.msra.mxu0 0.0
    %1524 = vmatprep.subr.mxu0 0.0
    %1525 = vmatpush1.msra.mxu0 0.0
    %1526 = vmatprep.subr.mxu0 0.0
    %1527 = vmatpush1.msra.mxu0 0.0
    %1528 = vmatprep.subr.mxu0 0.0
    %1529 = vmatpush1.msra.mxu0 0.0
    %1530 = vmatprep.subr.mxu0 0.0
    %1531 = vmatpush1.msra.mxu0 0.0
    %1532 = vmatprep.subr.mxu0 0.0
    %1533 = vmatpush1.msra.mxu0 0.0
    %1534 = vmatprep.subr.mxu0 0.0
    %1535 = vmatpush1.msra.mxu0 0.0
    %1536 = vmatprep.subr.mxu0 0.0
    %1537 = vmatpush1.msra.mxu0 0.0
    %1538 = vmatprep.subr.mxu0 0.0
    %1539 = vmatpush1.msra.mxu0 0.0
    %1540 = vmatprep.subr.mxu0 0.0
    %1541 = vmatpush1.msra.mxu0 0.0
    %1542 = vmatprep.subr.mxu0 0.0
    %1543 = vmatpush1.msra.mxu0 0.0
    %1544 = vmatprep.subr.mxu0 0.0
    %1545 = vmatpush1.msra.mxu0 0.0
    %1546 = vmatprep.subr.mxu0 0.0
    %1547 = vmatpush1.msra.mxu0 0.0
    %1548 = vmatprep.subr.mxu0 0.0
    %1549 = vmatpush1.msra.mxu0 0.0
    %1550 = vmatprep.subr.mxu0 0.0
    %1551 = vmatpush1.msra.mxu0 0.0
    %1552 = vmatprep.mubr.f32.mxu0 0.0
    %1553 = vmatmul.mubr.f32.gmra.mrb[0].mxu0 %v1480
    %v1554 = vpop.f32.mrb[0].mxu0
    %v1555 = vadd.f32 0.0, %v1554
    %v1556 = vpop.f32.mrb[0].mxu0
    %v1557 = vadd.f32 0.0, %v1556
    %1558 = vdwg.mxu0
    %1559 = vmatprep.subr.mxu0 %v401
    %1560 = vmatpush1.msra.mxu0 %v400
    %1561 = vmatprep.subr.mxu0 %v405
    %1562 = vmatpush1.msra.mxu0 %v404
    %1563 = vmatprep.subr.mxu0 %v409
    %1564 = vmatpush1.msra.mxu0 %v408
    %1565 = vmatprep.subr.mxu0 %v413
    %1566 = vmatpush1.msra.mxu0 %v412
    %1567 = vmatprep.subr.mxu0 %v417
    %1568 = vmatpush1.msra.mxu0 %v416
    %1569 = vmatprep.subr.mxu0 %v421
    %1570 = vmatpush1.msra.mxu0 %v420
    %1571 = vmatprep.subr.mxu0 %v425
    %1572 = vmatpush1.msra.mxu0 %v424
    %1573 = vmatprep.subr.mxu0 %v429
    %1574 = vmatpush1.msra.mxu0 %v428
    %1575 = vmatprep.subr.mxu0 %v433
    %1576 = vmatpush1.msra.mxu0 %v432
    %1577 = vmatprep.subr.mxu0 %v437
    %1578 = vmatpush1.msra.mxu0 %v436
    %1579 = vmatprep.subr.mxu0 %v441
    %1580 = vmatpush1.msra.mxu0 %v440
    %1581 = vmatprep.subr.mxu0 %v445
    %1582 = vmatpush1.msra.mxu0 %v444
    %1583 = vmatprep.subr.mxu0 %v449
    %1584 = vmatpush1.msra.mxu0 %v448
    %1585 = vmatprep.subr.mxu0 %v453
    %1586 = vmatpush1.msra.mxu0 %v452
    %1587 = vmatprep.subr.mxu0 %v457
    %1588 = vmatpush1.msra.mxu0 %v456
    %1589 = vmatprep.subr.mxu0 %v461
    %1590 = vmatpush1.msra.mxu0 %v460
    %1591 = vmatprep.subr.mxu0 0.0
    %1592 = vmatpush1.msra.mxu0 0.0
    %1593 = vmatprep.subr.mxu0 0.0
    %1594 = vmatpush1.msra.mxu0 0.0
    %1595 = vmatprep.subr.mxu0 0.0
    %1596 = vmatpush1.msra.mxu0 0.0
    %1597 = vmatprep.subr.mxu0 0.0
    %1598 = vmatpush1.msra.mxu0 0.0
    %1599 = vmatprep.subr.mxu0 0.0
    %1600 = vmatpush1.msra.mxu0 0.0
    %1601 = vmatprep.subr.mxu0 0.0
    %1602 = vmatpush1.msra.mxu0 0.0
    %1603 = vmatprep.subr.mxu0 0.0
    %1604 = vmatpush1.msra.mxu0 0.0
    %1605 = vmatprep.subr.mxu0 0.0
    %1606 = vmatpush1.msra.mxu0 0.0
    %1607 = vmatprep.subr.mxu0 0.0
    %1608 = vmatpush1.msra.mxu0 0.0
    %1609 = vmatprep.subr.mxu0 0.0
    %1610 = vmatpush1.msra.mxu0 0.0
    %1611 = vmatprep.subr.mxu0 0.0
    %1612 = vmatpush1.msra.mxu0 0.0
    %1613 = vmatprep.subr.mxu0 0.0
    %1614 = vmatpush1.msra.mxu0 0.0
    %1615 = vmatprep.subr.mxu0 0.0
    %1616 = vmatpush1.msra.mxu0 0.0
    %1617 = vmatprep.subr.mxu0 0.0
    %1618 = vmatpush1.msra.mxu0 0.0
    %1619 = vmatprep.subr.mxu0 0.0
    %1620 = vmatpush1.msra.mxu0 0.0
    %1621 = vmatprep.subr.mxu0 0.0
    %1622 = vmatpush1.msra.mxu0 0.0
    %1623 = vmatprep.mubr.f32.mxu0 0.0
    %1624 = vmatmul.mubr.f32.gmra.mrb[0].mxu0 %v1480
    %v1625 = vpop.f32.mrb[0].mxu0
    %v1626 = vadd.f32 0.0, %v1625
    %v1627 = vpop.f32.mrb[0].mxu0
    %v1628 = vadd.f32 0.0, %v1627
    %1629 = vdwg.mxu0
    %v1630 = vadd.f32 %v1484, %v1555
    %v1631 = vadd.f32 %v1485, %v1557
    %v1632 = vadd.f32 %v1486, %v1626
    %v1633 = vadd.f32 %v1487, %v1628
    %v1634 = vmul.f32 %v1630, 0.5
    %v1635 = vtanh.pop %v1634
    %v1636 = vmul.f32 %v1635, 0.5
    %v1637 = vadd.f32 %v1636, 0.5
    %v1638 = vmul.f32 %v1631, 0.5
    %v1639 = vtanh.pop %v1638
    %v1640 = vmul.f32 %v1639, 0.5
    %v1641 = vadd.f32 %v1640, 0.5
    %v1642 = vtanh.pop %v1632
    %v1643 = vmul.f32 %v1633, 0.5
    %v1644 = vtanh.pop %v1643
    %v1645 = vmul.f32 %v1644, 0.5
    %v1646 = vadd.f32 %v1645, 0.5
    %v1647 = vmul.f32 %v1641, %v1478
    %v1648 = vmul.f32 %v1637, %v1642
    %v1649 = vadd.f32 %v1647, %v1648
    %v1650 = vtanh.pop %v1649
    %v1651 = vmul.f32 %v1646, %v1650
    %s1652 = smul.u32 7, 4
    %s1653 = smul.addr %s1652, 8
    %s1654 = scalar_lea.vmem [#allocation2], %s1653
    %v1655 = vld [vmem:[%s1654] sm:$0xff]
    %v1656 = vld [vmem:[%s1654 + $0x8] sm:$0xff]
    %v1657 = vld [vmem:[%s1654 + $0x10] sm:$0xff]
    %v1658 = vld [vmem:[%s1654 + $0x18] sm:$0xff]
    %1659 = vmatprep.subr.mxu0 %v399
    %1660 = vmatpush1.msra.mxu0 %v398
    %1661 = vmatprep.subr.mxu0 %v403
    %1662 = vmatpush1.msra.mxu0 %v402
    %1663 = vmatprep.subr.mxu0 %v407
    %1664 = vmatpush1.msra.mxu0 %v406
    %1665 = vmatprep.subr.mxu0 %v411
    %1666 = vmatpush1.msra.mxu0 %v410
    %1667 = vmatprep.subr.mxu0 %v415
    %1668 = vmatpush1.msra.mxu0 %v414
    %1669 = vmatprep.subr.mxu0 %v419
    %1670 = vmatpush1.msra.mxu0 %v418
    %1671 = vmatprep.subr.mxu0 %v423
    %1672 = vmatpush1.msra.mxu0 %v422
    %1673 = vmatprep.subr.mxu0 %v427
    %1674 = vmatpush1.msra.mxu0 %v426
    %1675 = vmatprep.subr.mxu0 %v431
    %1676 = vmatpush1.msra.mxu0 %v430
    %1677 = vmatprep.subr.mxu0 %v435
    %1678 = vmatpush1.msra.mxu0 %v434
    %1679 = vmatprep.subr.mxu0 %v439
    %1680 = vmatpush1.msra.mxu0 %v438
    %1681 = vmatprep.subr.mxu0 %v443
    %1682 = vmatpush1.msra.mxu0 %v442
    %1683 = vmatprep.subr.mxu0 %v447
    %1684 = vmatpush1.msra.mxu0 %v446
    %1685 = vmatprep.subr.mxu0 %v451
    %1686 = vmatpush1.msra.mxu0 %v450
    %1687 = vmatprep.subr.mxu0 %v455
    %1688 = vmatpush1.msra.mxu0 %v454
    %1689 = vmatprep.subr.mxu0 %v459
    %1690 = vmatpush1.msra.mxu0 %v458
    %1691 = vmatprep.subr.mxu0 0.0
    %1692 = vmatpush1.msra.mxu0 0.0
    %1693 = vmatprep.subr.mxu0 0.0
    %1694 = vmatpush1.msra.mxu0 0.0
    %1695 = vmatprep.subr.mxu0 0.0
    %1696 = vmatpush1.msra.mxu0 0.0
    %1697 = vmatprep.subr.mxu0 0.0
    %1698 = vmatpush1.msra.mxu0 0.0
    %1699 = vmatprep.subr.mxu0 0.0
    %1700 = vmatpush1.msra.mxu0 0.0
    %1701 = vmatprep.subr.mxu0 0.0
    %1702 = vmatpush1.msra.mxu0 0.0
    %1703 = vmatprep.subr.mxu0 0.0
    %1704 = vmatpush1.msra.mxu0 0.0
    %1705 = vmatprep.subr.mxu0 0.0
    %1706 = vmatpush1.msra.mxu0 0.0
    %1707 = vmatprep.subr.mxu0 0.0
    %1708 = vmatpush1.msra.mxu0 0.0
    %1709 = vmatprep.subr.mxu0 0.0
    %1710 = vmatpush1.msra.mxu0 0.0
    %1711 = vmatprep.subr.mxu0 0.0
    %1712 = vmatpush1.msra.mxu0 0.0
    %1713 = vmatprep.subr.mxu0 0.0
    %1714 = vmatpush1.msra.mxu0 0.0
    %1715 = vmatprep.subr.mxu0 0.0
    %1716 = vmatpush1.msra.mxu0 0.0
    %1717 = vmatprep.subr.mxu0 0.0
    %1718 = vmatpush1.msra.mxu0 0.0
    %1719 = vmatprep.subr.mxu0 0.0
    %1720 = vmatpush1.msra.mxu0 0.0
    %1721 = vmatprep.subr.mxu0 0.0
    %1722 = vmatpush1.msra.mxu0 0.0
    %1723 = vmatprep.mubr.f32.mxu0 0.0
    %1724 = vmatmul.mubr.f32.gmra.mrb[0].mxu0 %v1651
    %v1725 = vpop.f32.mrb[0].mxu0
    %v1726 = vadd.f32 0.0, %v1725
    %v1727 = vpop.f32.mrb[0].mxu0
    %v1728 = vadd.f32 0.0, %v1727
    %1729 = vdwg.mxu0
    %1730 = vmatprep.subr.mxu0 %v401
    %1731 = vmatpush1.msra.mxu0 %v400
    %1732 = vmatprep.subr.mxu0 %v405
    %1733 = vmatpush1.msra.mxu0 %v404
    %1734 = vmatprep.subr.mxu0 %v409
    %1735 = vmatpush1.msra.mxu0 %v408
    %1736 = vmatprep.subr.mxu0 %v413
    %1737 = vmatpush1.msra.mxu0 %v412
    %1738 = vmatprep.subr.mxu0 %v417
    %1739 = vmatpush1.msra.mxu0 %v416
    %1740 = vmatprep.subr.mxu0 %v421
    %1741 = vmatpush1.msra.mxu0 %v420
    %1742 = vmatprep.subr.mxu0 %v425
    %1743 = vmatpush1.msra.mxu0 %v424
    %1744 = vmatprep.subr.mxu0 %v429
    %1745 = vmatpush1.msra.mxu0 %v428
    %1746 = vmatprep.subr.mxu0 %v433
    %1747 = vmatpush1.msra.mxu0 %v432
    %1748 = vmatprep.subr.mxu0 %v437
    %1749 = vmatpush1.msra.mxu0 %v436
    %1750 = vmatprep.subr.mxu0 %v441
    %1751 = vmatpush1.msra.mxu0 %v440
    %1752 = vmatprep.subr.mxu0 %v445
    %1753 = vmatpush1.msra.mxu0 %v444
    %1754 = vmatprep.subr.mxu0 %v449
    %1755 = vmatpush1.msra.mxu0 %v448
    %1756 = vmatprep.subr.mxu0 %v453
    %1757 = vmatpush1.msra.mxu0 %v452
    %1758 = vmatprep.subr.mxu0 %v457
    %1759 = vmatpush1.msra.mxu0 %v456
    %1760 = vmatprep.subr.mxu0 %v461
    %1761 = vmatpush1.msra.mxu0 %v460
    %1762 = vmatprep.subr.mxu0 0.0
    %1763 = vmatpush1.msra.mxu0 0.0
    %1764 = vmatprep.subr.mxu0 0.0
    %1765 = vmatpush1.msra.mxu0 0.0
    %1766 = vmatprep.subr.mxu0 0.0
    %1767 = vmatpush1.msra.mxu0 0.0
    %1768 = vmatprep.subr.mxu0 0.0
    %1769 = vmatpush1.msra.mxu0 0.0
    %1770 = vmatprep.subr.mxu0 0.0
    %1771 = vmatpush1.msra.mxu0 0.0
    %1772 = vmatprep.subr.mxu0 0.0
    %1773 = vmatpush1.msra.mxu0 0.0
    %1774 = vmatprep.subr.mxu0 0.0
    %1775 = vmatpush1.msra.mxu0 0.0
    %1776 = vmatprep.subr.mxu0 0.0
    %1777 = vmatpush1.msra.mxu0 0.0
    %1778 = vmatprep.subr.mxu0 0.0
    %1779 = vmatpush1.msra.mxu0 0.0
    %1780 = vmatprep.subr.mxu0 0.0
    %1781 = vmatpush1.msra.mxu0 0.0
    %1782 = vmatprep.subr.mxu0 0.0
    %1783 = vmatpush1.msra.mxu0 0.0
    %1784 = vmatprep.subr.mxu0 0.0
    %1785 = vmatpush1.msra.mxu0 0.0
    %1786 = vmatprep.subr.mxu0 0.0
    %1787 = vmatpush1.msra.mxu0 0.0
    %1788 = vmatprep.subr.mxu0 0.0
    %1789 = vmatpush1.msra.mxu0 0.0
    %1790 = vmatprep.subr.mxu0 0.0
    %1791 = vmatpush1.msra.mxu0 0.0
    %1792 = vmatprep.subr.mxu0 0.0
    %1793 = vmatpush1.msra.mxu0 0.0
    %1794 = vmatprep.mubr.f32.mxu0 0.0
    %1795 = vmatmul.mubr.f32.gmra.mrb[0].mxu0 %v1651
    %v1796 = vpop.f32.mrb[0].mxu0
    %v1797 = vadd.f32 0.0, %v1796
    %v1798 = vpop.f32.mrb[0].mxu0
    %v1799 = vadd.f32 0.0, %v1798
    %1800 = vdwg.mxu0
    %v1801 = vadd.f32 %v1655, %v1726
    %v1802 = vadd.f32 %v1656, %v1728
    %v1803 = vadd.f32 %v1657, %v1797
    %v1804 = vadd.f32 %v1658, %v1799
    %v1805 = vmul.f32 %v1801, 0.5
    %v1806 = vtanh.pop %v1805
    %v1807 = vmul.f32 %v1806, 0.5
    %v1808 = vadd.f32 %v1807, 0.5
    %v1809 = vmul.f32 %v1802, 0.5
    %v1810 = vtanh.pop %v1809
    %v1811 = vmul.f32 %v1810, 0.5
    %v1812 = vadd.f32 %v1811, 0.5
    %v1813 = vtanh.pop %v1803
    %v1814 = vmul.f32 %v1804, 0.5
    %v1815 = vtanh.pop %v1814
    %v1816 = vmul.f32 %v1815, 0.5
    %v1817 = vadd.f32 %v1816, 0.5
    %v1818 = vmul.f32 %v1812, %v1649
    %v1819 = vmul.f32 %v1808, %v1813
    %v1820 = vadd.f32 %v1818, %v1819
    %v1821 = vtanh.pop %v1820
    %v1822 = vmul.f32 %v1817, %v1821
    %1823 = vst [vmem:[#allocation3] sm:$0xff] %v1822
    %1824 = vst [vmem:[#allocation4] sm:$0xff] %v1820
    // Predicated region
    $region38: #{tpu_custom_call.1} parent=1 // pred_check
      %p1825 = pneg %p54
    $region39: #{tpu_custom_call.1} parent=1 // pred_check_branch
      %1827 = sbr.rel (%p1825) target = $region41
    $region40: #{tpu_custom_call.1} parent=1 // pred_region
      %v1828 = vld [vmem:[%s4] sm:$0x1]
      %v1830 = vlaneseq
      %v1831 = vshrl.u32 %v1830, 7
      %v1832 = vsub.s32 0, %v1831
      %v1833 = vrot.slane %v1828, %v1832
      %v1835 = vmul.f32 %v1822, %v1833
      %1836 = vadd.xlane.f32.xlu0 %v1835
      %v1837 = vpop.xlane.xlu0 %1836
      %v1838 = vld [vmem:[#allocation5] sm:$0x1]
      %1840 = vset.pattern.permute.xlu0 0
      %1841 = vperm.xlu0 %1840, %v1838
      %v1842 = vpop.permute.xlu0 %1841
      %v1844 = vlaneseq
      %v1845 = vshrl.u32 %v1844, 7
      %v1846 = vsub.s32 0, %v1845
      %v1847 = vrot.slane %v1842, %v1846
      %v1848 = vadd.f32 %v1837, %v1847
      %v1850 = vlaneseq
      %v1851 = vand.u32 %v1850, 127
      %v1852 = vlaneseq
      %v1853 = vshrl.u32 %v1852, 7
      %v1854 = vsub.s32 %v1851, %v1853
      %v1855 = vrot.slane %v1848, %v1854
      %vm1857 = vcmask 57344
      %1858 = vst.msk [vmem:[#allocation11] sm:$0x1] %vm1857, %v1855
    $region41: #{tpu_custom_call.1} parent=1 // pred_fallthru
      _
    // Predicated region
    $region42: #{tpu_custom_call.1} parent=1 // pred_check
      _
    $region43: #{tpu_custom_call.1} parent=1 // pred_check_branch
      %1860 = sbr.rel (0) target = $region45
    $region44: #{tpu_custom_call.1} parent=1 // pred_region
      %s1862 = ssub.s32 16, 16
      %1863 = vsyncadd [#allocation8], %s1862
      %s1865 = sshll.u32 [#allocation11], 4
      %s1866 = int_to_ptr.vmem [resolvable:$true] %s1865
      %1868 = dma.vmem_to_hbm [thread:$0]  %s1866, 16, %s6, [#allocation8]
    $region45: #{tpu_custom_call.1} parent=1 // pred_fallthru
      _
    // Predicated region
    $region46: #{tpu_custom_call.1} parent=1 // pred_check
      _
    $region47: #{tpu_custom_call.1} parent=1 // pred_check_branch
      %1870 = sbr.rel (0) target = $region49
    $region48: #{tpu_custom_call.1} parent=1 // pred_region
      %1871 = dma.done [#allocation8], 16
    $region49: #{tpu_custom_call.1} parent=1 // pred_fallthru
      _
    %1872 = vsyncpa [#allocation7], 1
    %1873 = vsyncpa [#allocation10], 1
    %1874 = vsyncpa [#allocation8], 1

</llo_original>
